<compile_context>
chip_gen: v6e
topology: v6e:2x2x1
jax: 0.10.0
libtpu: 0.0.40
codegen_flags: <defaults>
</compile_context>

<pallas_src>
import math

import jax
import jax.numpy as jnp
from jax.experimental import pallas as pl
from jax.experimental.pallas import tpu as pltpu

# --- small, BERT-like config (bert-base-chinese scaled down) -----------------
B = 2          # batch
S = 8          # sequence length
H = 32         # hidden size
NH = 2         # attention heads
HD = H // NH   # head dim
FF = 4 * H     # intermediate (FFN) size
NLAYERS = 2    # encoder layers
VOCAB = 128
MAX_POS = 64
LN_EPS = 1e-12
T = B * S      # tokens


# ------------------------------ kernel helpers -------------------------------
def _layernorm(x, gamma, beta):
    mu = jnp.mean(x, axis=-1, keepdims=True)
    var = jnp.mean((x - mu) ** 2, axis=-1, keepdims=True)
    return (x - mu) * jax.lax.rsqrt(var + LN_EPS) * gamma + beta


def _gelu(x):
    c = math.sqrt(2.0 / math.pi)
    return 0.5 * x * (1.0 + jnp.tanh(c * (x + 0.044715 * x * x * x)))


# ------------------------------ fused encoder kernel -------------------------
def encoder_kernel(emb_ref, mask_ref, emb_g_ref, emb_b_ref,
                   wq_ref, bq_ref, wk_ref, bk_ref, wv_ref, bv_ref,
                   wo_ref, bo_ref, ln1_g_ref, ln1_b_ref,
                   w1_ref, b1_ref, w2_ref, b2_ref, ln2_g_ref, ln2_b_ref,
                   o_ref, h_scr):
    l = pl.program_id(0)

    # Layer 0: embedding LayerNorm, hidden state initialized in VMEM scratch.
    @pl.when(l == 0)
    def _():
        h_scr[...] = _layernorm(emb_ref[...], emb_g_ref[...], emb_b_ref[...])

    h = h_scr[...]                               # [T, H] f32 (VMEM-resident)
    h_bf = h.astype(jnp.bfloat16)                # MXU operands in bf16

    scale = 1.0 / math.sqrt(HD)
    add_m = mask_ref[...]                        # [B, 1, S] additive mask (f32), read once

    # ---- self-attention: heads statically unrolled, weights pre-split per head
    attn_acc = jnp.zeros((T, H), jnp.float32)
    for hh in range(NH):
        q_h = (jnp.dot(h_bf, wq_ref[hh], preferred_element_type=jnp.float32)
               + bq_ref[hh]) * scale                         # [T, HD] f32
        k_h = (jnp.dot(h_bf, wk_ref[hh], preferred_element_type=jnp.float32)
               + bk_ref[hh])
        v_h = (jnp.dot(h_bf, wv_ref[hh], preferred_element_type=jnp.float32)
               + bv_ref[hh])

        q3 = q_h.reshape(B, S, HD).astype(jnp.bfloat16)
        k3 = k_h.reshape(B, S, HD).astype(jnp.bfloat16)
        v3 = v_h.reshape(B, S, HD).astype(jnp.bfloat16)

        s = jnp.einsum('bqd,bkd->bqk', q3, k3,
                       preferred_element_type=jnp.float32)   # [B, S, S] f32
        s = s + add_m                                        # mask add in f32
        s = s - jnp.max(s, axis=-1, keepdims=True)
        p = jnp.exp(s)
        p = p * pl.reciprocal(jnp.sum(p, axis=-1, keepdims=True), approx=True)

        ctx = jnp.einsum('bqk,bkd->bqd', p.astype(jnp.bfloat16), v3,
                         preferred_element_type=jnp.float32) # [B, S, HD]
        ctx2 = ctx.reshape(T, HD).astype(jnp.bfloat16)
        # Sum per-head output projections (replaces lane-axis concatenate).
        attn_acc = attn_acc + jnp.dot(ctx2, wo_ref[hh],
                                      preferred_element_type=jnp.float32)

    attn_out = attn_acc + bo_ref[...]
    h1 = _layernorm(h + attn_out, ln1_g_ref[...], ln1_b_ref[...])

    # ---- feed-forward (GELU) + residual + LayerNorm --------------------------
    ffi = (jnp.dot(h1.astype(jnp.bfloat16), w1_ref[...],
                   preferred_element_type=jnp.float32) + b1_ref[...])
    ffi = _gelu(ffi)
    ffo = (jnp.dot(ffi.astype(jnp.bfloat16), w2_ref[...],
                   preferred_element_type=jnp.float32) + b2_ref[...])
    h_new = _layernorm(h1 + ffo, ln2_g_ref[...], ln2_b_ref[...])

    h_scr[...] = h_new                            # carry hidden state to next layer

    @pl.when(l == pl.num_programs(0) - 1)
    def _():
        o_ref[...] = h_new                        # single store at the end


# ------------------------------ pallas_call wrapper ---------------------------
def _layer_spec_4d(d2, d3):
    return pl.BlockSpec((None, NH, d2, d3), lambda l: (l, 0, 0, 0))


def _layer_spec_3d(d1, d2):
    return pl.BlockSpec((None, d1, d2), lambda l: (l, 0, 0))


def encoder_fused(emb2, add_mask, emb_gamma, emb_beta, stacked):
    grid_spec = pltpu.PrefetchScalarGridSpec(
        num_scalar_prefetch=0,
        grid=(NLAYERS,),
        in_specs=[
            pl.BlockSpec((T, H), lambda l: (0, 0)),        # embeddings (resident)
            pl.BlockSpec((B, 1, S), lambda l: (0, 0, 0)),  # additive mask (resident)
            pl.BlockSpec((1, H), lambda l: (0, 0)),        # emb LN gamma
            pl.BlockSpec((1, H), lambda l: (0, 0)),        # emb LN beta
            _layer_spec_4d(H, HD),                         # Wq  [NH, H, HD]
            _layer_spec_4d(1, HD),                         # bq  [NH, 1, HD]
            _layer_spec_4d(H, HD),                         # Wk
            _layer_spec_4d(1, HD),                         # bk
            _layer_spec_4d(H, HD),                         # Wv
            _layer_spec_4d(1, HD),                         # bv
            _layer_spec_4d(HD, H),                         # Wo  [NH, HD, H]
            _layer_spec_3d(1, H),                          # bo
            _layer_spec_3d(1, H),                          # attn LN gamma
            _layer_spec_3d(1, H),                          # attn LN beta
            _layer_spec_3d(H, FF),                         # W1
            _layer_spec_3d(1, FF),                         # b1
            _layer_spec_3d(FF, H),                         # W2
            _layer_spec_3d(1, H),                          # b2
            _layer_spec_3d(1, H),                          # ffn LN gamma
            _layer_spec_3d(1, H),                          # ffn LN beta
        ],
        out_specs=pl.BlockSpec((T, H), lambda l: (0, 0)),
        scratch_shapes=[pltpu.VMEM((T, H), jnp.float32)],  # hidden state carry
    )
    return pl.pallas_call(
        encoder_kernel,
        out_shape=jax.ShapeDtypeStruct((T, H), jnp.float32),
        grid_spec=grid_spec,
        compiler_params=pltpu.CompilerParams(
            dimension_semantics=("arbitrary",)),           # sequential layer axis
    )(emb2, add_mask, emb_gamma, emb_beta, *stacked)


# ------------------------------ parameter init --------------------------------
def init_params(key):
    def dense(k, shape, scale=0.02):
        return jax.random.normal(k, shape, dtype=jnp.float32) * scale

    keys = iter(jax.random.split(key, 8 + NLAYERS * 16))
    params = {
        'word_emb': dense(next(keys), (VOCAB, H)),
        'pos_emb': dense(next(keys), (MAX_POS, H)),
        'type_emb': dense(next(keys), (2, H)),
        'emb_gamma': jnp.ones((H,), jnp.float32),
        'emb_beta': jnp.zeros((H,), jnp.float32),
        'layers': [],
    }
    for _ in range(NLAYERS):
        lp = (
            dense(next(keys), (H, H)), jnp.zeros((H,), jnp.float32),   # Wq, bq
            dense(next(keys), (H, H)), jnp.zeros((H,), jnp.float32),   # Wk, bk
            dense(next(keys), (H, H)), jnp.zeros((H,), jnp.float32),   # Wv, bv
            dense(next(keys), (H, H)), jnp.zeros((H,), jnp.float32),   # Wo, bo
            jnp.ones((H,), jnp.float32), jnp.zeros((H,), jnp.float32), # attn LN
            dense(next(keys), (H, FF)), jnp.zeros((FF,), jnp.float32), # W1, b1
            dense(next(keys), (FF, H)), jnp.zeros((H,), jnp.float32),  # W2, b2
            jnp.ones((H,), jnp.float32), jnp.zeros((H,), jnp.float32), # ffn LN
        )
        params['layers'].append(lp)
    return params


def stack_and_split(layers):
    """Stack per-layer params along a leading layer axis and split heads.

    Plain-JAX layout plumbing (outside the kernel): weight matrices go to
    bfloat16 for the MXU; biases / LayerNorm params stay f32.
    """
    def st(i):
        return jnp.stack([lp[i] for lp in layers], axis=0)   # [NLAYERS, ...]

    def split_in(w):    # [L, H, H]  -> [L, NH, H, HD]   (Wq/Wk/Wv columns per head)
        return w.reshape(NLAYERS, H, NH, HD).transpose(0, 2, 1, 3)

    def split_b(b):     # [L, H]     -> [L, NH, 1, HD]
        return b.reshape(NLAYERS, NH, 1, HD)

    def split_out(w):   # [L, H, H]  -> [L, NH, HD, H]   (Wo rows per head)
        return w.reshape(NLAYERS, NH, HD, H)

    def row(v, d):      # [L, d]     -> [L, 1, d]
        return v.reshape(NLAYERS, 1, d)

    bf = jnp.bfloat16
    return (
        split_in(st(0)).astype(bf), split_b(st(1)),     # Wq, bq
        split_in(st(2)).astype(bf), split_b(st(3)),     # Wk, bk
        split_in(st(4)).astype(bf), split_b(st(5)),     # Wv, bv
        split_out(st(6)).astype(bf), row(st(7), H),     # Wo, bo
        row(st(8), H), row(st(9), H),                   # attn LN gamma, beta
        st(10).astype(bf), row(st(11), FF),             # W1, b1
        st(12).astype(bf), row(st(13), H),              # W2, b2
        row(st(14), H), row(st(15), H),                 # ffn LN gamma, beta
    )


# ------------------------------ forward (BertEncoder) -------------------------
def bert_encoder_forward(params, input_ids, attention_mask):
    # Embeddings: word + position + token_type(0); gathers are plain-JAX glue.
    emb = (jnp.take(params['word_emb'], input_ids, axis=0)
           + params['pos_emb'][:S][None, :, :]
           + params['type_emb'][0][None, None, :])            # [B, S, H]
    emb2 = emb.reshape(T, H).astype(jnp.float32)

    # HF-style additive mask: 0 where attended, -10000 where padded.
    add_mask = (1.0 - attention_mask.astype(jnp.float32)) * -10000.0
    add_mask = add_mask[:, None, :]                           # [B, 1, S]

    stacked = stack_and_split(params['layers'])
    hidden = encoder_fused(emb2, add_mask,
                           params['emb_gamma'].reshape(1, H),
                           params['emb_beta'].reshape(1, H),
                           stacked)                           # [T, H]

    cls_hidden = hidden.reshape(B, S, H)[:, 0, :]             # [B, H]
    # nn.Dropout(0.5) is identity in eval/inference mode.
    return cls_hidden


# ------------------------------ main ------------------------------------------
if __name__ == "__main__":
    key = jax.random.PRNGKey(0)
    k_param, k_ids = jax.random.split(key)

    params = init_params(k_param)
    input_ids = jax.random.randint(k_ids, (B, S), 0, VOCAB, dtype=jnp.int32)
    attention_mask = jnp.ones((B, S), dtype=jnp.int32)
    attention_mask = attention_mask.at[1, 6:].set(0)   # some padding on batch 1

    out = bert_encoder_forward(params, input_ids, attention_mask)
    out = jax.block_until_ready(out)

    assert out.shape == (B, H), out.shape
    assert bool(jnp.all(jnp.isfinite(out)))
    print("KERNEL_OK")
</pallas_src>

<mosaic_0001>
module attributes {stable_mosaic.version = 11 : i64} {
  func.func @encoder_kernel(%arg0: i32, %arg1: memref<16x32xf32, #tpu.memory_space<vmem>>, %arg2: memref<2x1x8xf32, #tpu.memory_space<vmem>>, %arg3: memref<1x32xf32, #tpu.memory_space<vmem>>, %arg4: memref<1x32xf32, #tpu.memory_space<vmem>>, %arg5: memref<1x2x32x16xbf16, #tpu.memory_space<vmem>>, %arg6: memref<1x2x1x16xf32, #tpu.memory_space<vmem>>, %arg7: memref<1x2x32x16xbf16, #tpu.memory_space<vmem>>, %arg8: memref<1x2x1x16xf32, #tpu.memory_space<vmem>>, %arg9: memref<1x2x32x16xbf16, #tpu.memory_space<vmem>>, %arg10: memref<1x2x1x16xf32, #tpu.memory_space<vmem>>, %arg11: memref<1x2x16x32xbf16, #tpu.memory_space<vmem>>, %arg12: memref<1x1x32xf32, #tpu.memory_space<vmem>>, %arg13: memref<1x1x32xf32, #tpu.memory_space<vmem>>, %arg14: memref<1x1x32xf32, #tpu.memory_space<vmem>>, %arg15: memref<1x32x128xbf16, #tpu.memory_space<vmem>>, %arg16: memref<1x1x128xf32, #tpu.memory_space<vmem>>, %arg17: memref<1x128x32xbf16, #tpu.memory_space<vmem>>, %arg18: memref<1x1x32xf32, #tpu.memory_space<vmem>>, %arg19: memref<1x1x32xf32, #tpu.memory_space<vmem>>, %arg20: memref<1x1x32xf32, #tpu.memory_space<vmem>>, %arg21: memref<16x32xf32, #tpu.memory_space<vmem>>, %arg22: memref<16x32xf32, #tpu.memory_space<vmem>>) attributes {dimension_semantics = [#tpu.dimension_semantics<arbitrary>], iteration_bounds = array<i64: 2>, scalar_prefetch = 0 : i64, scratch_operands = 1 : i64, tpu.core_type = #tpu.core_type<tc>, window_params = [{pipeline_mode = #tpu.pipeline_mode<synchronous>, transform_indices = @transform_0, window_bounds = array<i64: 16, 32>}, {pipeline_mode = #tpu.pipeline_mode<synchronous>, transform_indices = @transform_1, window_bounds = array<i64: 2, 1, 8>}, {pipeline_mode = #tpu.pipeline_mode<synchronous>, transform_indices = @transform_2, window_bounds = array<i64: 1, 32>}, {pipeline_mode = #tpu.pipeline_mode<synchronous>, transform_indices = @transform_3, window_bounds = array<i64: 1, 32>}, {transform_indices = @transform_4, window_bounds = array<i64: 1, 2, 32, 16>}, {transform_indices = @transform_5, window_bounds = array<i64: 1, 2, 1, 16>}, {transform_indices = @transform_6, window_bounds = array<i64: 1, 2, 32, 16>}, {transform_indices = @transform_7, window_bounds = array<i64: 1, 2, 1, 16>}, {transform_indices = @transform_8, window_bounds = array<i64: 1, 2, 32, 16>}, {transform_indices = @transform_9, window_bounds = array<i64: 1, 2, 1, 16>}, {transform_indices = @transform_10, window_bounds = array<i64: 1, 2, 16, 32>}, {transform_indices = @transform_11, window_bounds = array<i64: 1, 1, 32>}, {transform_indices = @transform_12, window_bounds = array<i64: 1, 1, 32>}, {transform_indices = @transform_13, window_bounds = array<i64: 1, 1, 32>}, {transform_indices = @transform_14, window_bounds = array<i64: 1, 32, 128>}, {transform_indices = @transform_15, window_bounds = array<i64: 1, 1, 128>}, {transform_indices = @transform_16, window_bounds = array<i64: 1, 128, 32>}, {transform_indices = @transform_17, window_bounds = array<i64: 1, 1, 32>}, {transform_indices = @transform_18, window_bounds = array<i64: 1, 1, 32>}, {transform_indices = @transform_19, window_bounds = array<i64: 1, 1, 32>}, {pipeline_mode = #tpu.pipeline_mode<synchronous>, transform_indices = @transform_20, window_bounds = array<i64: 16, 32>}]} {
    %c0_i32 = arith.constant 0 : i32
    %0 = arith.cmpi eq, %arg0, %c0_i32 : i32
    %1 = arith.extui %0 : i1 to i32
    %c0_i32_0 = arith.constant 0 : i32
    %2 = arith.cmpi ne, %1, %c0_i32_0 : i32
    scf.if %2 {
      %c0_124 = arith.constant 0 : index
      %c0_125 = arith.constant 0 : index
      %198 = vector.load %arg1[%c0_124, %c0_125] : memref<16x32xf32, #tpu.memory_space<vmem>>, vector<16x32xf32>
      %c0_126 = arith.constant 0 : index
      %c0_127 = arith.constant 0 : index
      %199 = vector.load %arg3[%c0_126, %c0_127] : memref<1x32xf32, #tpu.memory_space<vmem>>, vector<1x32xf32>
      %c0_128 = arith.constant 0 : index
      %c0_129 = arith.constant 0 : index
      %200 = vector.load %arg4[%c0_128, %c0_129] : memref<1x32xf32, #tpu.memory_space<vmem>>, vector<1x32xf32>
      %cst_130 = arith.constant dense<0.000000e+00> : vector<16xf32>
      %201 = vector.multi_reduction <add>, %198, %cst_130 [1] : vector<16x32xf32> to vector<16xf32>
      %202 = vector.shape_cast %201 : vector<16xf32> to vector<16x1xf32>
      %cst_131 = arith.constant 3.200000e+01 : f32
      %203 = vector.broadcast %cst_131 : f32 to vector<16x1xf32>
      %204 = arith.divf %202, %203 : vector<16x1xf32>
      %205 = vector.broadcast %204 : vector<16x1xf32> to vector<16x32xf32>
      %206 = arith.subf %198, %205 : vector<16x32xf32>
      %207 = arith.mulf %206, %206 : vector<16x32xf32>
      %cst_132 = arith.constant dense<0.000000e+00> : vector<16xf32>
      %208 = vector.multi_reduction <add>, %207, %cst_132 [1] : vector<16x32xf32> to vector<16xf32>
      %209 = vector.shape_cast %208 : vector<16xf32> to vector<16x1xf32>
      %cst_133 = arith.constant 3.200000e+01 : f32
      %210 = vector.broadcast %cst_133 : f32 to vector<16x1xf32>
      %211 = arith.divf %209, %210 : vector<16x1xf32>
      %212 = vector.broadcast %204 : vector<16x1xf32> to vector<16x32xf32>
      %213 = arith.subf %198, %212 : vector<16x32xf32>
      %cst_134 = arith.constant 9.99999996E-13 : f32
      %214 = vector.broadcast %cst_134 : f32 to vector<16x1xf32>
      %215 = arith.addf %211, %214 : vector<16x1xf32>
      %216 = math.rsqrt %215 : vector<16x1xf32>
      %217 = vector.broadcast %216 : vector<16x1xf32> to vector<16x32xf32>
      %218 = arith.mulf %213, %217 : vector<16x32xf32>
      %219 = vector.broadcast %199 : vector<1x32xf32> to vector<16x32xf32>
      %220 = arith.mulf %218, %219 : vector<16x32xf32>
      %221 = vector.broadcast %200 : vector<1x32xf32> to vector<16x32xf32>
      %222 = arith.addf %220, %221 : vector<16x32xf32>
      %c0_135 = arith.constant 0 : index
      %c0_136 = arith.constant 0 : index
      %223 = vector.load %arg22[%c0_135, %c0_136] : memref<16x32xf32, #tpu.memory_space<vmem>>, vector<16x32xf32>
      tpu.vector_store %arg22[%c0_135, %c0_136], %222 {strides = array<i32>} : memref<16x32xf32, #tpu.memory_space<vmem>>, vector<16x32xf32>,
    } else {
    }
    %c0 = arith.constant 0 : index
    %c0_1 = arith.constant 0 : index
    %3 = vector.load %arg22[%c0, %c0_1] : memref<16x32xf32, #tpu.memory_space<vmem>>, vector<16x32xf32>
    %4 = arith.truncf %3 : vector<16x32xf32> to vector<16x32xbf16>
    %c0_2 = arith.constant 0 : index
    %c0_3 = arith.constant 0 : index
    %c0_4 = arith.constant 0 : index
    %5 = vector.load %arg2[%c0_2, %c0_3, %c0_4] : memref<2x1x8xf32, #tpu.memory_space<vmem>>, vector<2x1x8xf32>
    %cst = arith.constant 0.000000e+00 : f32
    %6 = vector.broadcast %cst : f32 to vector<16x32xf32>
    %c0_5 = arith.constant 0 : index
    %c0_6 = arith.constant 0 : index
    %c0_7 = arith.constant 0 : index
    %c0_8 = arith.constant 0 : index
    %7 = vector.load %arg5[%c0_5, %c0_6, %c0_7, %c0_8] : memref<1x2x32x16xbf16, #tpu.memory_space<vmem>>, vector<1x1x32x16xbf16>
    %8 = vector.shape_cast %7 : vector<1x1x32x16xbf16> to vector<32x16xbf16>
    %cst_9 = arith.constant dense<0.000000e+00> : vector<16x16xf32>
    %9 = tpu.matmul %4, %8, %cst_9 {dimension_numbers = #tpu.dot_dimension_numbers<[1], [0], [0], [1], [0, 0, 1, 1], [], []>} : vector<16x32xbf16>, vector<32x16xbf16>, vector<16x16xf32> -> vector<16x16xf32>
    %c0_10 = arith.constant 0 : index
    %c0_11 = arith.constant 0 : index
    %c0_12 = arith.constant 0 : index
    %c0_13 = arith.constant 0 : index
    %10 = vector.load %arg6[%c0_10, %c0_11, %c0_12, %c0_13] : memref<1x2x1x16xf32, #tpu.memory_space<vmem>>, vector<1x1x1x16xf32>
    %11 = vector.shape_cast %10 : vector<1x1x1x16xf32> to vector<1x16xf32>
    %12 = vector.broadcast %11 : vector<1x16xf32> to vector<16x16xf32>
    %13 = arith.addf %9, %12 : vector<16x16xf32>
    %cst_14 = arith.constant 2.500000e-01 : f32
    %14 = vector.broadcast %cst_14 : f32 to vector<16x16xf32>
    %15 = arith.mulf %13, %14 : vector<16x16xf32>
    %c0_15 = arith.constant 0 : index
    %c0_16 = arith.constant 0 : index
    %c0_17 = arith.constant 0 : index
    %c0_18 = arith.constant 0 : index
    %16 = vector.load %arg7[%c0_15, %c0_16, %c0_17, %c0_18] : memref<1x2x32x16xbf16, #tpu.memory_space<vmem>>, vector<1x1x32x16xbf16>
    %17 = vector.shape_cast %16 : vector<1x1x32x16xbf16> to vector<32x16xbf16>
    %cst_19 = arith.constant dense<0.000000e+00> : vector<16x16xf32>
    %18 = tpu.matmul %4, %17, %cst_19 {dimension_numbers = #tpu.dot_dimension_numbers<[1], [0], [0], [1], [0, 0, 1, 1], [], []>} : vector<16x32xbf16>, vector<32x16xbf16>, vector<16x16xf32> -> vector<16x16xf32>
    %c0_20 = arith.constant 0 : index
    %c0_21 = arith.constant 0 : index
    %c0_22 = arith.constant 0 : index
    %c0_23 = arith.constant 0 : index
    %19 = vector.load %arg8[%c0_20, %c0_21, %c0_22, %c0_23] : memref<1x2x1x16xf32, #tpu.memory_space<vmem>>, vector<1x1x1x16xf32>
    %20 = vector.shape_cast %19 : vector<1x1x1x16xf32> to vector<1x16xf32>
    %21 = vector.broadcast %20 : vector<1x16xf32> to vector<16x16xf32>
    %22 = arith.addf %18, %21 : vector<16x16xf32>
    %c0_24 = arith.constant 0 : index
    %c0_25 = arith.constant 0 : index
    %c0_26 = arith.constant 0 : index
    %c0_27 = arith.constant 0 : index
    %23 = vector.load %arg9[%c0_24, %c0_25, %c0_26, %c0_27] : memref<1x2x32x16xbf16, #tpu.memory_space<vmem>>, vector<1x1x32x16xbf16>
    %24 = vector.shape_cast %23 : vector<1x1x32x16xbf16> to vector<32x16xbf16>
    %cst_28 = arith.constant dense<0.000000e+00> : vector<16x16xf32>
    %25 = tpu.matmul %4, %24, %cst_28 {dimension_numbers = #tpu.dot_dimension_numbers<[1], [0], [0], [1], [0, 0, 1, 1], [], []>} : vector<16x32xbf16>, vector<32x16xbf16>, vector<16x16xf32> -> vector<16x16xf32>
    %c0_29 = arith.constant 0 : index
    %c0_30 = arith.constant 0 : index
    %c0_31 = arith.constant 0 : index
    %c0_32 = arith.constant 0 : index
    %26 = vector.load %arg10[%c0_29, %c0_30, %c0_31, %c0_32] : memref<1x2x1x16xf32, #tpu.memory_space<vmem>>, vector<1x1x1x16xf32>
    %27 = vector.shape_cast %26 : vector<1x1x1x16xf32> to vector<1x16xf32>
    %28 = vector.broadcast %27 : vector<1x16xf32> to vector<16x16xf32>
    %29 = arith.addf %25, %28 : vector<16x16xf32>
    %30 = vector.shape_cast %15 : vector<16x16xf32> to vector<2x8x16xf32>
    %31 = arith.truncf %30 : vector<2x8x16xf32> to vector<2x8x16xbf16>
    %32 = vector.shape_cast %22 : vector<16x16xf32> to vector<2x8x16xf32>
    %33 = arith.truncf %32 : vector<2x8x16xf32> to vector<2x8x16xbf16>
    %34 = vector.shape_cast %29 : vector<16x16xf32> to vector<2x8x16xf32>
    %35 = arith.truncf %34 : vector<2x8x16xf32> to vector<2x8x16xbf16>
    "tpu.trace_start"() <{level = 10 : i32, message = "bqd,bkd->bqk"}> : () -> ()
    %cst_33 = arith.constant dense<0.000000e+00> : vector<2x8x8xf32>
    %36 = tpu.matmul %31, %33, %cst_33 {dimension_numbers = #tpu.dot_dimension_numbers<[2], [2], [1], [1], [0, 0, 0, 1, 1, 1], [0], [0]>} : vector<2x8x16xbf16>, vector<2x8x16xbf16>, vector<2x8x8xf32> -> vector<2x8x8xf32>
    "tpu.trace_stop"() : () -> ()
    %37 = vector.broadcast %5 : vector<2x1x8xf32> to vector<2x8x8xf32>
    %38 = arith.addf %36, %37 : vector<2x8x8xf32>
    %cst_34 = arith.constant dense<0xFF800000> : vector<2x8xf32>
    %39 = vector.multi_reduction <maximumf>, %38, %cst_34 [2] : vector<2x8x8xf32> to vector<2x8xf32>
    %40 = vector.shape_cast %39 : vector<2x8xf32> to vector<2x8x1xf32>
    %41 = vector.broadcast %40 : vector<2x8x1xf32> to vector<2x8x8xf32>
    %42 = arith.subf %38, %41 : vector<2x8x8xf32>
    %43 = math.exp %42 : vector<2x8x8xf32>
    %cst_35 = arith.constant dense<0.000000e+00> : vector<2x8xf32>
    %44 = vector.multi_reduction <add>, %43, %cst_35 [2] : vector<2x8x8xf32> to vector<2x8xf32>
    %45 = vector.shape_cast %44 : vector<2x8xf32> to vector<2x8x1xf32>
    %46 = tpu.reciprocal %45 {approx = true} : vector<2x8x1xf32> -> vector<2x8x1xf32>
    %47 = vector.broadcast %46 : vector<2x8x1xf32> to vector<2x8x8xf32>
    %48 = arith.mulf %43, %47 : vector<2x8x8xf32>
    %49 = arith.truncf %48 : vector<2x8x8xf32> to vector<2x8x8xbf16>
    "tpu.trace_start"() <{level = 10 : i32, message = "bqk,bkd->bqd"}> : () -> ()
    %cst_36 = arith.constant dense<0.000000e+00> : vector<2x8x16xf32>
    %50 = tpu.matmul %49, %35, %cst_36 {dimension_numbers = #tpu.dot_dimension_numbers<[2], [1], [1], [2], [0, 0, 0, 1, 1, 2], [0], [0]>} : vector<2x8x8xbf16>, vector<2x8x16xbf16>, vector<2x8x16xf32> -> vector<2x8x16xf32>
    "tpu.trace_stop"() : () -> ()
    %51 = vector.shape_cast %50 : vector<2x8x16xf32> to vector<16x16xf32>
    %52 = arith.truncf %51 : vector<16x16xf32> to vector<16x16xbf16>
    %c0_37 = arith.constant 0 : index
    %c0_38 = arith.constant 0 : index
    %c0_39 = arith.constant 0 : index
    %c0_40 = arith.constant 0 : index
    %53 = vector.load %arg11[%c0_37, %c0_38, %c0_39, %c0_40] : memref<1x2x16x32xbf16, #tpu.memory_space<vmem>>, vector<1x1x16x32xbf16>
    %54 = vector.shape_cast %53 : vector<1x1x16x32xbf16> to vector<16x32xbf16>
    %cst_41 = arith.constant dense<0.000000e+00> : vector<16x32xf32>
    %55 = tpu.matmul %52, %54, %cst_41 {dimension_numbers = #tpu.dot_dimension_numbers<[1], [0], [0], [1], [0, 0, 1, 1], [], []>} : vector<16x16xbf16>, vector<16x32xbf16>, vector<16x32xf32> -> vector<16x32xf32>
    %56 = arith.addf %6, %55 : vector<16x32xf32>
    %c0_42 = arith.constant 0 : index
    %c1 = arith.constant 1 : index
    %c0_43 = arith.constant 0 : index
    %c0_44 = arith.constant 0 : index
    %57 = vector.load %arg5[%c0_42, %c1, %c0_43, %c0_44] : memref<1x2x32x16xbf16, #tpu.memory_space<vmem>>, vector<1x1x32x16xbf16>
    %58 = vector.shape_cast %57 : vector<1x1x32x16xbf16> to vector<32x16xbf16>
    %cst_45 = arith.constant dense<0.000000e+00> : vector<16x16xf32>
    %59 = tpu.matmul %4, %58, %cst_45 {dimension_numbers = #tpu.dot_dimension_numbers<[1], [0], [0], [1], [0, 0, 1, 1], [], []>} : vector<16x32xbf16>, vector<32x16xbf16>, vector<16x16xf32> -> vector<16x16xf32>
    %c0_46 = arith.constant 0 : index
    %c1_47 = arith.constant 1 : index
    %c0_48 = arith.constant 0 : index
    %c0_49 = arith.constant 0 : index
    %60 = vector.load %arg6[%c0_46, %c1_47, %c0_48, %c0_49] : memref<1x2x1x16xf32, #tpu.memory_space<vmem>>, vector<1x1x1x16xf32>
    %61 = vector.shape_cast %60 : vector<1x1x1x16xf32> to vector<1x16xf32>
    %62 = vector.broadcast %61 : vector<1x16xf32> to vector<16x16xf32>
    %63 = arith.addf %59, %62 : vector<16x16xf32>
    %cst_50 = arith.constant 2.500000e-01 : f32
    %64 = vector.broadcast %cst_50 : f32 to vector<16x16xf32>
    %65 = arith.mulf %63, %64 : vector<16x16xf32>
    %c0_51 = arith.constant 0 : index
    %c1_52 = arith.constant 1 : index
    %c0_53 = arith.constant 0 : index
    %c0_54 = arith.constant 0 : index
    %66 = vector.load %arg7[%c0_51, %c1_52, %c0_53, %c0_54] : memref<1x2x32x16xbf16, #tpu.memory_space<vmem>>, vector<1x1x32x16xbf16>
    %67 = vector.shape_cast %66 : vector<1x1x32x16xbf16> to vector<32x16xbf16>
    %cst_55 = arith.constant dense<0.000000e+00> : vector<16x16xf32>
    %68 = tpu.matmul %4, %67, %cst_55 {dimension_numbers = #tpu.dot_dimension_numbers<[1], [0], [0], [1], [0, 0, 1, 1], [], []>} : vector<16x32xbf16>, vector<32x16xbf16>, vector<16x16xf32> -> vector<16x16xf32>
    %c0_56 = arith.constant 0 : index
    %c1_57 = arith.constant 1 : index
    %c0_58 = arith.constant 0 : index
    %c0_59 = arith.constant 0 : index
    %69 = vector.load %arg8[%c0_56, %c1_57, %c0_58, %c0_59] : memref<1x2x1x16xf32, #tpu.memory_space<vmem>>, vector<1x1x1x16xf32>
    %70 = vector.shape_cast %69 : vector<1x1x1x16xf32> to vector<1x16xf32>
    %71 = vector.broadcast %70 : vector<1x16xf32> to vector<16x16xf32>
    %72 = arith.addf %68, %71 : vector<16x16xf32>
    %c0_60 = arith.constant 0 : index
    %c1_61 = arith.constant 1 : index
    %c0_62 = arith.constant 0 : index
    %c0_63 = arith.constant 0 : index
    %73 = vector.load %arg9[%c0_60, %c1_61, %c0_62, %c0_63] : memref<1x2x32x16xbf16, #tpu.memory_space<vmem>>, vector<1x1x32x16xbf16>
    %74 = vector.shape_cast %73 : vector<1x1x32x16xbf16> to vector<32x16xbf16>
    %cst_64 = arith.constant dense<0.000000e+00> : vector<16x16xf32>
    %75 = tpu.matmul %4, %74, %cst_64 {dimension_numbers = #tpu.dot_dimension_numbers<[1], [0], [0], [1], [0, 0, 1, 1], [], []>} : vector<16x32xbf16>, vector<32x16xbf16>, vector<16x16xf32> -> vector<16x16xf32>
    %c0_65 = arith.constant 0 : index
    %c1_66 = arith.constant 1 : index
    %c0_67 = arith.constant 0 : index
    %c0_68 = arith.constant 0 : index
    %76 = vector.load %arg10[%c0_65, %c1_66, %c0_67, %c0_68] : memref<1x2x1x16xf32, #tpu.memory_space<vmem>>, vector<1x1x1x16xf32>
    %77 = vector.shape_cast %76 : vector<1x1x1x16xf32> to vector<1x16xf32>
    %78 = vector.broadcast %77 : vector<1x16xf32> to vector<16x16xf32>
    %79 = arith.addf %75, %78 : vector<16x16xf32>
    %80 = vector.shape_cast %65 : vector<16x16xf32> to vector<2x8x16xf32>
    %81 = arith.truncf %80 : vector<2x8x16xf32> to vector<2x8x16xbf16>
    %82 = vector.shape_cast %72 : vector<16x16xf32> to vector<2x8x16xf32>
    %83 = arith.truncf %82 : vector<2x8x16xf32> to vector<2x8x16xbf16>
    %84 = vector.shape_cast %79 : vector<16x16xf32> to vector<2x8x16xf32>
    %85 = arith.truncf %84 : vector<2x8x16xf32> to vector<2x8x16xbf16>
    "tpu.trace_start"() <{level = 10 : i32, message = "bqd,bkd->bqk"}> : () -> ()
    %cst_69 = arith.constant dense<0.000000e+00> : vector<2x8x8xf32>
    %86 = tpu.matmul %81, %83, %cst_69 {dimension_numbers = #tpu.dot_dimension_numbers<[2], [2], [1], [1], [0, 0, 0, 1, 1, 1], [0], [0]>} : vector<2x8x16xbf16>, vector<2x8x16xbf16>, vector<2x8x8xf32> -> vector<2x8x8xf32>
    "tpu.trace_stop"() : () -> ()
    %87 = vector.broadcast %5 : vector<2x1x8xf32> to vector<2x8x8xf32>
    %88 = arith.addf %86, %87 : vector<2x8x8xf32>
    %cst_70 = arith.constant dense<0xFF800000> : vector<2x8xf32>
    %89 = vector.multi_reduction <maximumf>, %88, %cst_70 [2] : vector<2x8x8xf32> to vector<2x8xf32>
    %90 = vector.shape_cast %89 : vector<2x8xf32> to vector<2x8x1xf32>
    %91 = vector.broadcast %90 : vector<2x8x1xf32> to vector<2x8x8xf32>
    %92 = arith.subf %88, %91 : vector<2x8x8xf32>
    %93 = math.exp %92 : vector<2x8x8xf32>
    %cst_71 = arith.constant dense<0.000000e+00> : vector<2x8xf32>
    %94 = vector.multi_reduction <add>, %93, %cst_71 [2] : vector<2x8x8xf32> to vector<2x8xf32>
    %95 = vector.shape_cast %94 : vector<2x8xf32> to vector<2x8x1xf32>
    %96 = tpu.reciprocal %95 {approx = true} : vector<2x8x1xf32> -> vector<2x8x1xf32>
    %97 = vector.broadcast %96 : vector<2x8x1xf32> to vector<2x8x8xf32>
    %98 = arith.mulf %93, %97 : vector<2x8x8xf32>
    %99 = arith.truncf %98 : vector<2x8x8xf32> to vector<2x8x8xbf16>
    "tpu.trace_start"() <{level = 10 : i32, message = "bqk,bkd->bqd"}> : () -> ()
    %cst_72 = arith.constant dense<0.000000e+00> : vector<2x8x16xf32>
    %100 = tpu.matmul %99, %85, %cst_72 {dimension_numbers = #tpu.dot_dimension_numbers<[2], [1], [1], [2], [0, 0, 0, 1, 1, 2], [0], [0]>} : vector<2x8x8xbf16>, vector<2x8x16xbf16>, vector<2x8x16xf32> -> vector<2x8x16xf32>
    "tpu.trace_stop"() : () -> ()
    %101 = vector.shape_cast %100 : vector<2x8x16xf32> to vector<16x16xf32>
    %102 = arith.truncf %101 : vector<16x16xf32> to vector<16x16xbf16>
    %c0_73 = arith.constant 0 : index
    %c1_74 = arith.constant 1 : index
    %c0_75 = arith.constant 0 : index
    %c0_76 = arith.constant 0 : index
    %103 = vector.load %arg11[%c0_73, %c1_74, %c0_75, %c0_76] : memref<1x2x16x32xbf16, #tpu.memory_space<vmem>>, vector<1x1x16x32xbf16>
    %104 = vector.shape_cast %103 : vector<1x1x16x32xbf16> to vector<16x32xbf16>
    %cst_77 = arith.constant dense<0.000000e+00> : vector<16x32xf32>
    %105 = tpu.matmul %102, %104, %cst_77 {dimension_numbers = #tpu.dot_dimension_numbers<[1], [0], [0], [1], [0, 0, 1, 1], [], []>} : vector<16x16xbf16>, vector<16x32xbf16>, vector<16x32xf32> -> vector<16x32xf32>
    %106 = arith.addf %56, %105 : vector<16x32xf32>
    %c0_78 = arith.constant 0 : index
    %c0_79 = arith.constant 0 : index
    %c0_80 = arith.constant 0 : index
    %107 = vector.load %arg12[%c0_78, %c0_79, %c0_80] : memref<1x1x32xf32, #tpu.memory_space<vmem>>, vector<1x1x32xf32>
    %108 = vector.shape_cast %107 : vector<1x1x32xf32> to vector<1x32xf32>
    %109 = vector.broadcast %108 : vector<1x32xf32> to vector<16x32xf32>
    %110 = arith.addf %106, %109 : vector<16x32xf32>
    %111 = arith.addf %3, %110 : vector<16x32xf32>
    %c0_81 = arith.constant 0 : index
    %c0_82 = arith.constant 0 : index
    %c0_83 = arith.constant 0 : index
    %112 = vector.load %arg13[%c0_81, %c0_82, %c0_83] : memref<1x1x32xf32, #tpu.memory_space<vmem>>, vector<1x1x32xf32>
    %113 = vector.shape_cast %112 : vector<1x1x32xf32> to vector<1x32xf32>
    %c0_84 = arith.constant 0 : index
    %c0_85 = arith.constant 0 : index
    %c0_86 = arith.constant 0 : index
    %114 = vector.load %arg14[%c0_84, %c0_85, %c0_86] : memref<1x1x32xf32, #tpu.memory_space<vmem>>, vector<1x1x32xf32>
    %115 = vector.shape_cast %114 : vector<1x1x32xf32> to vector<1x32xf32>
    %cst_87 = arith.constant dense<0.000000e+00> : vector<16xf32>
    %116 = vector.multi_reduction <add>, %111, %cst_87 [1] : vector<16x32xf32> to vector<16xf32>
    %117 = vector.shape_cast %116 : vector<16xf32> to vector<16x1xf32>
    %cst_88 = arith.constant 3.200000e+01 : f32
    %118 = vector.broadcast %cst_88 : f32 to vector<16x1xf32>
    %119 = arith.divf %117, %118 : vector<16x1xf32>
    %120 = vector.broadcast %119 : vector<16x1xf32> to vector<16x32xf32>
    %121 = arith.subf %111, %120 : vector<16x32xf32>
    %122 = arith.mulf %121, %121 : vector<16x32xf32>
    %cst_89 = arith.constant dense<0.000000e+00> : vector<16xf32>
    %123 = vector.multi_reduction <add>, %122, %cst_89 [1] : vector<16x32xf32> to vector<16xf32>
    %124 = vector.shape_cast %123 : vector<16xf32> to vector<16x1xf32>
    %cst_90 = arith.constant 3.200000e+01 : f32
    %125 = vector.broadcast %cst_90 : f32 to vector<16x1xf32>
    %126 = arith.divf %124, %125 : vector<16x1xf32>
    %127 = vector.broadcast %119 : vector<16x1xf32> to vector<16x32xf32>
    %128 = arith.subf %111, %127 : vector<16x32xf32>
    %cst_91 = arith.constant 9.99999996E-13 : f32
    %129 = vector.broadcast %cst_91 : f32 to vector<16x1xf32>
    %130 = arith.addf %126, %129 : vector<16x1xf32>
    %131 = math.rsqrt %130 : vector<16x1xf32>
    %132 = vector.broadcast %131 : vector<16x1xf32> to vector<16x32xf32>
    %133 = arith.mulf %128, %132 : vector<16x32xf32>
    %134 = vector.broadcast %113 : vector<1x32xf32> to vector<16x32xf32>
    %135 = arith.mulf %133, %134 : vector<16x32xf32>
    %136 = vector.broadcast %115 : vector<1x32xf32> to vector<16x32xf32>
    %137 = arith.addf %135, %136 : vector<16x32xf32>
    %138 = arith.truncf %137 : vector<16x32xf32> to vector<16x32xbf16>
    %c0_92 = arith.constant 0 : index
    %c0_93 = arith.constant 0 : index
    %c0_94 = arith.constant 0 : index
    %139 = vector.load %arg15[%c0_92, %c0_93, %c0_94] : memref<1x32x128xbf16, #tpu.memory_space<vmem>>, vector<1x32x128xbf16>
    %140 = vector.shape_cast %139 : vector<1x32x128xbf16> to vector<32x128xbf16>
    %cst_95 = arith.constant dense<0.000000e+00> : vector<16x128xf32>
    %141 = tpu.matmul %138, %140, %cst_95 {dimension_numbers = #tpu.dot_dimension_numbers<[1], [0], [0], [1], [0, 0, 1, 1], [], []>} : vector<16x32xbf16>, vector<32x128xbf16>, vector<16x128xf32> -> vector<16x128xf32>
    %c0_96 = arith.constant 0 : index
    %c0_97 = arith.constant 0 : index
    %c0_98 = arith.constant 0 : index
    %142 = vector.load %arg16[%c0_96, %c0_97, %c0_98] : memref<1x1x128xf32, #tpu.memory_space<vmem>>, vector<1x1x128xf32>
    %143 = vector.shape_cast %142 : vector<1x1x128xf32> to vector<1x128xf32>
    %144 = vector.broadcast %143 : vector<1x128xf32> to vector<16x128xf32>
    %145 = arith.addf %141, %144 : vector<16x128xf32>
    %cst_99 = arith.constant 5.000000e-01 : f32
    %146 = vector.broadcast %cst_99 : f32 to vector<16x128xf32>
    %147 = arith.mulf %146, %145 : vector<16x128xf32>
    %cst_100 = arith.constant 4.471500e-02 : f32
    %148 = vector.broadcast %cst_100 : f32 to vector<16x128xf32>
    %149 = arith.mulf %148, %145 : vector<16x128xf32>
    %150 = arith.mulf %149, %145 : vector<16x128xf32>
    %151 = arith.mulf %150, %145 : vector<16x128xf32>
    %152 = arith.addf %145, %151 : vector<16x128xf32>
    %cst_101 = arith.constant 0.797884583 : f32
    %153 = vector.broadcast %cst_101 : f32 to vector<16x128xf32>
    %154 = arith.mulf %153, %152 : vector<16x128xf32>
    %155 = math.tanh %154 : vector<16x128xf32>
    %cst_102 = arith.constant 1.000000e+00 : f32
    %156 = vector.broadcast %cst_102 : f32 to vector<16x128xf32>
    %157 = arith.addf %156, %155 : vector<16x128xf32>
    %158 = arith.mulf %147, %157 : vector<16x128xf32>
    %159 = arith.truncf %158 : vector<16x128xf32> to vector<16x128xbf16>
    %c0_103 = arith.constant 0 : index
    %c0_104 = arith.constant 0 : index
    %c0_105 = arith.constant 0 : index
    %160 = vector.load %arg17[%c0_103, %c0_104, %c0_105] : memref<1x128x32xbf16, #tpu.memory_space<vmem>>, vector<1x128x32xbf16>
    %161 = vector.shape_cast %160 : vector<1x128x32xbf16> to vector<128x32xbf16>
    %cst_106 = arith.constant dense<0.000000e+00> : vector<16x32xf32>
    %162 = tpu.matmul %159, %161, %cst_106 {dimension_numbers = #tpu.dot_dimension_numbers<[1], [0], [0], [1], [0, 0, 1, 1], [], []>} : vector<16x128xbf16>, vector<128x32xbf16>, vector<16x32xf32> -> vector<16x32xf32>
    %c0_107 = arith.constant 0 : index
    %c0_108 = arith.constant 0 : index
    %c0_109 = arith.constant 0 : index
    %163 = vector.load %arg18[%c0_107, %c0_108, %c0_109] : memref<1x1x32xf32, #tpu.memory_space<vmem>>, vector<1x1x32xf32>
    %164 = vector.shape_cast %163 : vector<1x1x32xf32> to vector<1x32xf32>
    %165 = vector.broadcast %164 : vector<1x32xf32> to vector<16x32xf32>
    %166 = arith.addf %162, %165 : vector<16x32xf32>
    %167 = arith.addf %137, %166 : vector<16x32xf32>
    %c0_110 = arith.constant 0 : index
    %c0_111 = arith.constant 0 : index
    %c0_112 = arith.constant 0 : index
    %168 = vector.load %arg19[%c0_110, %c0_111, %c0_112] : memref<1x1x32xf32, #tpu.memory_space<vmem>>, vector<1x1x32xf32>
    %169 = vector.shape_cast %168 : vector<1x1x32xf32> to vector<1x32xf32>
    %c0_113 = arith.constant 0 : index
    %c0_114 = arith.constant 0 : index
    %c0_115 = arith.constant 0 : index
    %170 = vector.load %arg20[%c0_113, %c0_114, %c0_115] : memref<1x1x32xf32, #tpu.memory_space<vmem>>, vector<1x1x32xf32>
    %171 = vector.shape_cast %170 : vector<1x1x32xf32> to vector<1x32xf32>
    %cst_116 = arith.constant dense<0.000000e+00> : vector<16xf32>
    %172 = vector.multi_reduction <add>, %167, %cst_116 [1] : vector<16x32xf32> to vector<16xf32>
    %173 = vector.shape_cast %172 : vector<16xf32> to vector<16x1xf32>
    %cst_117 = arith.constant 3.200000e+01 : f32
    %174 = vector.broadcast %cst_117 : f32 to vector<16x1xf32>
    %175 = arith.divf %173, %174 : vector<16x1xf32>
    %176 = vector.broadcast %175 : vector<16x1xf32> to vector<16x32xf32>
    %177 = arith.subf %167, %176 : vector<16x32xf32>
    %178 = arith.mulf %177, %177 : vector<16x32xf32>
    %cst_118 = arith.constant dense<0.000000e+00> : vector<16xf32>
    %179 = vector.multi_reduction <add>, %178, %cst_118 [1] : vector<16x32xf32> to vector<16xf32>
    %180 = vector.shape_cast %179 : vector<16xf32> to vector<16x1xf32>
    %cst_119 = arith.constant 3.200000e+01 : f32
    %181 = vector.broadcast %cst_119 : f32 to vector<16x1xf32>
    %182 = arith.divf %180, %181 : vector<16x1xf32>
    %183 = vector.broadcast %175 : vector<16x1xf32> to vector<16x32xf32>
    %184 = arith.subf %167, %183 : vector<16x32xf32>
    %cst_120 = arith.constant 9.99999996E-13 : f32
    %185 = vector.broadcast %cst_120 : f32 to vector<16x1xf32>
    %186 = arith.addf %182, %185 : vector<16x1xf32>
    %187 = math.rsqrt %186 : vector<16x1xf32>
    %188 = vector.broadcast %187 : vector<16x1xf32> to vector<16x32xf32>
    %189 = arith.mulf %184, %188 : vector<16x32xf32>
    %190 = vector.broadcast %169 : vector<1x32xf32> to vector<16x32xf32>
    %191 = arith.mulf %189, %190 : vector<16x32xf32>
    %192 = vector.broadcast %171 : vector<1x32xf32> to vector<16x32xf32>
    %193 = arith.addf %191, %192 : vector<16x32xf32>
    %c0_121 = arith.constant 0 : index
    %c0_122 = arith.constant 0 : index
    %194 = vector.load %arg22[%c0_121, %c0_122] : memref<16x32xf32, #tpu.memory_space<vmem>>, vector<16x32xf32>
    tpu.vector_store %arg22[%c0_121, %c0_122], %193 {strides = array<i32>} : memref<16x32xf32, #tpu.memory_space<vmem>>, vector<16x32xf32>,
    %c1_i32 = arith.constant 1 : i32
    %195 = arith.cmpi eq, %arg0, %c1_i32 : i32
    %196 = arith.extui %195 : i1 to i32
    %c0_i32_123 = arith.constant 0 : i32
    %197 = arith.cmpi ne, %196, %c0_i32_123 : i32
    scf.if %197 {
      %c0_124 = arith.constant 0 : index
      %c0_125 = arith.constant 0 : index
      %198 = vector.load %arg21[%c0_124, %c0_125] : memref<16x32xf32, #tpu.memory_space<vmem>>, vector<16x32xf32>
      tpu.vector_store %arg21[%c0_124, %c0_125], %193 {strides = array<i32>} : memref<16x32xf32, #tpu.memory_space<vmem>>, vector<16x32xf32>,
    } else {
    }
    return
  }
  func.func @transform_0(%arg0: i32) -> (i32, i32) {
    %c0_i32 = arith.constant 0 : i32
    %c0_i32_0 = arith.constant 0 : i32
    %c0_i32_1 = arith.constant 0 : i32
    return %c0_i32, %c0_i32_0 : i32, i32
  }
  func.func @transform_1(%arg0: i32) -> (i32, i32, i32) {
    %c0_i32 = arith.constant 0 : i32
    %c0_i32_0 = arith.constant 0 : i32
    %c0_i32_1 = arith.constant 0 : i32
    %c0_i32_2 = arith.constant 0 : i32
    return %c0_i32, %c0_i32_0, %c0_i32_1 : i32, i32, i32
  }
  func.func @transform_2(%arg0: i32) -> (i32, i32) {
    %c0_i32 = arith.constant 0 : i32
    %c0_i32_0 = arith.constant 0 : i32
    %c0_i32_1 = arith.constant 0 : i32
    return %c0_i32, %c0_i32_0 : i32, i32
  }
  func.func @transform_3(%arg0: i32) -> (i32, i32) {
    %c0_i32 = arith.constant 0 : i32
    %c0_i32_0 = arith.constant 0 : i32
    %c0_i32_1 = arith.constant 0 : i32
    return %c0_i32, %c0_i32_0 : i32, i32
  }
  func.func @transform_4(%arg0: i32) -> (i32, i32, i32, i32) {
    %c0_i32 = arith.constant 0 : i32
    %c0_i32_0 = arith.constant 0 : i32
    %c0_i32_1 = arith.constant 0 : i32
    %c0_i32_2 = arith.constant 0 : i32
    return %arg0, %c0_i32, %c0_i32_0, %c0_i32_1 : i32, i32, i32, i32
  }
  func.func @transform_5(%arg0: i32) -> (i32, i32, i32, i32) {
    %c0_i32 = arith.constant 0 : i32
    %c0_i32_0 = arith.constant 0 : i32
    %c0_i32_1 = arith.constant 0 : i32
    %c0_i32_2 = arith.constant 0 : i32
    return %arg0, %c0_i32, %c0_i32_0, %c0_i32_1 : i32, i32, i32, i32
  }
  func.func @transform_6(%arg0: i32) -> (i32, i32, i32, i32) {
    %c0_i32 = arith.constant 0 : i32
    %c0_i32_0 = arith.constant 0 : i32
    %c0_i32_1 = arith.constant 0 : i32
    %c0_i32_2 = arith.constant 0 : i32
    return %arg0, %c0_i32, %c0_i32_0, %c0_i32_1 : i32, i32, i32, i32
  }
  func.func @transform_7(%arg0: i32) -> (i32, i32, i32, i32) {
    %c0_i32 = arith.constant 0 : i32
    %c0_i32_0 = arith.constant 0 : i32
    %c0_i32_1 = arith.constant 0 : i32
    %c0_i32_2 = arith.constant 0 : i32
    return %arg0, %c0_i32, %c0_i32_0, %c0_i32_1 : i32, i32, i32, i32
  }
  func.func @transform_8(%arg0: i32) -> (i32, i32, i32, i32) {
    %c0_i32 = arith.constant 0 : i32
    %c0_i32_0 = arith.constant 0 : i32
    %c0_i32_1 = arith.constant 0 : i32
    %c0_i32_2 = arith.constant 0 : i32
    return %arg0, %c0_i32, %c0_i32_0, %c0_i32_1 : i32, i32, i32, i32
  }
  func.func @transform_9(%arg0: i32) -> (i32, i32, i32, i32) {
    %c0_i32 = arith.constant 0 : i32
    %c0_i32_0 = arith.constant 0 : i32
    %c0_i32_1 = arith.constant 0 : i32
    %c0_i32_2 = arith.constant 0 : i32
    return %arg0, %c0_i32, %c0_i32_0, %c0_i32_1 : i32, i32, i32, i32
  }
  func.func @transform_10(%arg0: i32) -> (i32, i32, i32, i32) {
    %c0_i32 = arith.constant 0 : i32
    %c0_i32_0 = arith.constant 0 : i32
    %c0_i32_1 = arith.constant 0 : i32
    %c0_i32_2 = arith.constant 0 : i32
    return %arg0, %c0_i32, %c0_i32_0, %c0_i32_1 : i32, i32, i32, i32
  }
  func.func @transform_11(%arg0: i32) -> (i32, i32, i32) {
    %c0_i32 = arith.constant 0 : i32
    %c0_i32_0 = arith.constant 0 : i32
    %c0_i32_1 = arith.constant 0 : i32
    return %arg0, %c0_i32, %c0_i32_0 : i32, i32, i32
  }
  func.func @transform_12(%arg0: i32) -> (i32, i32, i32) {
    %c0_i32 = arith.constant 0 : i32
    %c0_i32_0 = arith.constant 0 : i32
    %c0_i32_1 = arith.constant 0 : i32
    return %arg0, %c0_i32, %c0_i32_0 : i32, i32, i32
  }
  func.func @transform_13(%arg0: i32) -> (i32, i32, i32) {
    %c0_i32 = arith.constant 0 : i32
    %c0_i32_0 = arith.constant 0 : i32
    %c0_i32_1 = arith.constant 0 : i32
    return %arg0, %c0_i32, %c0_i32_0 : i32, i32, i32
  }
  func.func @transform_14(%arg0: i32) -> (i32, i32, i32) {
    %c0_i32 = arith.constant 0 : i32
    %c0_i32_0 = arith.constant 0 : i32
    %c0_i32_1 = arith.constant 0 : i32
    return %arg0, %c0_i32, %c0_i32_0 : i32, i32, i32
  }
  func.func @transform_15(%arg0: i32) -> (i32, i32, i32) {
    %c0_i32 = arith.constant 0 : i32
    %c0_i32_0 = arith.constant 0 : i32
    %c0_i32_1 = arith.constant 0 : i32
    return %arg0, %c0_i32, %c0_i32_0 : i32, i32, i32
  }
  func.func @transform_16(%arg0: i32) -> (i32, i32, i32) {
    %c0_i32 = arith.constant 0 : i32
    %c0_i32_0 = arith.constant 0 : i32
    %c0_i32_1 = arith.constant 0 : i32
    return %arg0, %c0_i32, %c0_i32_0 : i32, i32, i32
  }
  func.func @transform_17(%arg0: i32) -> (i32, i32, i32) {
    %c0_i32 = arith.constant 0 : i32
    %c0_i32_0 = arith.constant 0 : i32
    %c0_i32_1 = arith.constant 0 : i32
    return %arg0, %c0_i32, %c0_i32_0 : i32, i32, i32
  }
  func.func @transform_18(%arg0: i32) -> (i32, i32, i32) {
    %c0_i32 = arith.constant 0 : i32
    %c0_i32_0 = arith.constant 0 : i32
    %c0_i32_1 = arith.constant 0 : i32
    return %arg0, %c0_i32, %c0_i32_0 : i32, i32, i32
  }
  func.func @transform_19(%arg0: i32) -> (i32, i32, i32) {
    %c0_i32 = arith.constant 0 : i32
    %c0_i32_0 = arith.constant 0 : i32
    %c0_i32_1 = arith.constant 0 : i32
    return %arg0, %c0_i32, %c0_i32_0 : i32, i32, i32
  }
  func.func @transform_20(%arg0: i32) -> (i32, i32) {
    %c0_i32 = arith.constant 0 : i32
    %c0_i32_0 = arith.constant 0 : i32
    %c0_i32_1 = arith.constant 0 : i32
    return %c0_i32, %c0_i32_0 : i32, i32
  }
}

</mosaic_0001>

<llo_original>
// kernel: tpu_custom_call.1
$region0: #{tpu_custom_call.1}
  #allocation0 [shape = 'u32[]', space=smem, size = 0x4, offset = 0x4, fixed_abs, tag = 'smem constant byte address 0x4 - core index']
  #allocation1 [shape = 'u32[144,128]{1,0:T(1,128)}', space=vmem, size = 0x12000, scoped, tag = 'internal scratch']
  #allocation2 [shape = 'f32[16,32]{1,0:T(8,128)}', space=vmem, size = 0x2000, scoped, tag = 'scratch operand']
  %s0 = inlined_call_operand.vmem [shape: f32[16,32], index: 0, kind: input, shape index: {}]
  %s1 = inlined_call_operand.vmem [shape: f32[2,1,8], index: 1, kind: input, shape index: {}]
  %s2 = inlined_call_operand.vmem [shape: f32[1,32], index: 2, kind: input, shape index: {}]
  %s3 = inlined_call_operand.vmem [shape: f32[1,32], index: 3, kind: input, shape index: {}]
  %s4 = inlined_call_operand.vmem [shape: bf16[2,2,32,16], index: 4, kind: input, shape index: {}]
  %s5 = inlined_call_operand.vmem [shape: f32[2,2,1,16], index: 5, kind: input, shape index: {}]
  %s6 = inlined_call_operand.vmem [shape: bf16[2,2,32,16], index: 6, kind: input, shape index: {}]
  %s7 = inlined_call_operand.vmem [shape: f32[2,2,1,16], index: 7, kind: input, shape index: {}]
  %s8 = inlined_call_operand.vmem [shape: bf16[2,2,32,16], index: 8, kind: input, shape index: {}]
  %s9 = inlined_call_operand.vmem [shape: f32[2,2,1,16], index: 9, kind: input, shape index: {}]
  %s10 = inlined_call_operand.vmem [shape: bf16[2,2,16,32], index: 10, kind: input, shape index: {}]
  %s11 = inlined_call_operand.vmem [shape: f32[2,1,32], index: 11, kind: input, shape index: {}]
  %s12 = inlined_call_operand.vmem [shape: f32[2,1,32], index: 12, kind: input, shape index: {}]
  %s13 = inlined_call_operand.vmem [shape: f32[2,1,32], index: 13, kind: input, shape index: {}]
  %s14 = inlined_call_operand.vmem [shape: bf16[2,32,128], index: 14, kind: input, shape index: {}]
  %s15 = inlined_call_operand.vmem [shape: f32[2,1,128], index: 15, kind: input, shape index: {}]
  %s16 = inlined_call_operand.vmem [shape: bf16[2,128,32], index: 16, kind: input, shape index: {}]
  %s17 = inlined_call_operand.vmem [shape: f32[2,1,32], index: 17, kind: input, shape index: {}]
  %s18 = inlined_call_operand.vmem [shape: f32[2,1,32], index: 18, kind: input, shape index: {}]
  %s19 = inlined_call_operand.vmem [shape: f32[2,1,32], index: 19, kind: input, shape index: {}]
  %s20 = inlined_call_operand.hbm [shape: f32[16,32], index: 20, kind: output, shape index: {}]
  %s21 = sld [smem:[#allocation0]]
  $region121: #{tpu_custom_call.1} parent=0
    _
  %s23 = ssub.s32 1, %s21
  %s24 = scalar_select 0, %s23, %s21
  $region1: #{tpu_custom_call.1} parent=0
    #allocation3 [shape = 'u8[8192]{0}', space=vmem, size = 0x2000, scoped, tag = 'output window, operand 0, single buffered']
    #allocation4 [shape = 's32[2]{0}', space=sflag, size = 0x8, scoped, tag = 'scoped memory for tpu_custom_call.1']
    %25 = vsyncpa [#allocation4], 0
    loop: start=0, step=1, limit=4
    $region2: #{tpu_custom_call.1} parent=1 // loop_pre_header
      _
    $region3: #{tpu_custom_call.1} parent=1 // loop_header
      %s27 = sphi 0, %s31
      %p28 = scmp.ge.s32.totalorder %s27, 4
      %s35 = sphi 0, %s35
      %s37 = sphi 0, %s35
      %s38 = sphi 0, %s37
      %s52 = sphi 0, %s38
      %s56 = sphi 0, %s56
      %s58 = sphi 0, %s56
      %s59 = sphi 0, %s58
      %s73 = sphi 0, %s59
      %s77 = sphi 0, %s77
      %s79 = sphi 0, %s77
      %s80 = sphi 0, %s79
      %s94 = sphi 0, %s80
      %s98 = sphi 0, %s98
      %s100 = sphi 0, %s98
      %s101 = sphi 0, %s100
      %s115 = sphi 0, %s101
      %s121 = sphi 0, %s123
      %s124 = sphi 0, %s121
      %s125 = sphi 0, %s124
      %s141 = sphi 0, %s125
      %s147 = sphi 0, %s149
      %s150 = sphi 0, %s147
      %s151 = sphi 0, %s150
      %s167 = sphi 0, %s151
      %s173 = sphi 0, %s175
      %s176 = sphi 0, %s173
      %s177 = sphi 0, %s176
      %s193 = sphi 0, %s177
      %s199 = sphi 0, %s201
      %s202 = sphi 0, %s199
      %s203 = sphi 0, %s202
      %s219 = sphi 0, %s203
      %s225 = sphi 0, %s227
      %s228 = sphi 0, %s225
      %s229 = sphi 0, %s228
      %s245 = sphi 0, %s229
      %s251 = sphi 0, %s253
      %s254 = sphi 0, %s251
      %s255 = sphi 0, %s254
      %s271 = sphi 0, %s255
      %s277 = sphi 0, %s279
      %s280 = sphi 0, %s277
      %s281 = sphi 0, %s280
      %s297 = sphi 0, %s281
      %s303 = sphi 0, %s305
      %s306 = sphi 0, %s303
      %s307 = sphi 0, %s306
      %s323 = sphi 0, %s307
      %s329 = sphi 0, %s331
      %s332 = sphi 0, %s329
      %s333 = sphi 0, %s332
      %s349 = sphi 0, %s333
      %s355 = sphi 0, %s357
      %s358 = sphi 0, %s355
      %s359 = sphi 0, %s358
      %s375 = sphi 0, %s359
      %s381 = sphi 0, %s383
      %s384 = sphi 0, %s381
      %s385 = sphi 0, %s384
      %s401 = sphi 0, %s385
      %s407 = sphi 0, %s409
      %s410 = sphi 0, %s407
      %s411 = sphi 0, %s410
      %s427 = sphi 0, %s411
      %s433 = sphi 0, %s435
      %s436 = sphi 0, %s433
      %s437 = sphi 0, %s436
      %s453 = sphi 0, %s437
      %s459 = sphi 0, %s461
      %s462 = sphi 0, %s459
      %s463 = sphi 0, %s462
      %s479 = sphi 0, %s463
      %s485 = sphi 0, %s487
      %s488 = sphi 0, %s485
      %s489 = sphi 0, %s488
      %s505 = sphi 0, %s489
      %s511 = sphi 0, %s513
      %s514 = sphi 0, %s511
      %s515 = sphi 0, %s514
      %s531 = sphi 0, %s515
      %s535 = sphi 0, %s535
      %s537 = sphi 0, %s535
      %s538 = sphi 0, %s537
      %s552 = sphi 0, %s538
    $region4: #{tpu_custom_call.1} parent=1 // loop_header_branch
      %30 = sbr.rel (%p28) target = $region8
    $region5: #{tpu_custom_call.1} parent=1 // loop_body
      %s32 = ssub.s32 %s27, 1
      %s33 = ssub.s32 %s27, 2
      %s34 = sadd.s32 %s27, 1
      %s36 = sadd.s32 %s35, 1
      %p39 = scmp.eq.s32.totalorder %s27, 1
      %p40 = scmp.ne.s32.totalorder %s35, %s37
      %p41 = scmp.eq.s32.totalorder %s27, 0
      %p42 = por %p40, %p41
      %p43 = scmp.ne.s32.totalorder %s35, %s37
      %p44 = scmp.eq.s32.totalorder %s32, 1
      %p45 = por %p43, %p44
      %p46 = scmp.ne.s32.totalorder %s37, %s38
      %p47 = scmp.eq.s32.totalorder %s32, 0
      %p48 = por %p46, %p47
      %p49 = scmp.ne.s32.totalorder %s37, %s38
      %p50 = scmp.eq.s32.totalorder %s33, 1
      %p51 = por %p49, %p50
      %p53 = scmp.ne.s32.totalorder %s38, %s52
      %p54 = scmp.eq.s32.totalorder %s33, 0
      %p55 = por %p53, %p54
      %s57 = sadd.s32 %s56, 1
      %p60 = scmp.eq.s32.totalorder %s27, 1
      %p61 = scmp.ne.s32.totalorder %s56, %s58
      %p62 = scmp.eq.s32.totalorder %s27, 0
      %p63 = por %p61, %p62
      %p64 = scmp.ne.s32.totalorder %s56, %s58
      %p65 = scmp.eq.s32.totalorder %s32, 1
      %p66 = por %p64, %p65
      %p67 = scmp.ne.s32.totalorder %s58, %s59
      %p68 = scmp.eq.s32.totalorder %s32, 0
      %p69 = por %p67, %p68
      %p70 = scmp.ne.s32.totalorder %s58, %s59
      %p71 = scmp.eq.s32.totalorder %s33, 1
      %p72 = por %p70, %p71
      %p74 = scmp.ne.s32.totalorder %s59, %s73
      %p75 = scmp.eq.s32.totalorder %s33, 0
      %p76 = por %p74, %p75
      %s78 = sadd.s32 %s77, 1
      %p81 = scmp.eq.s32.totalorder %s27, 1
      %p82 = scmp.ne.s32.totalorder %s77, %s79
      %p83 = scmp.eq.s32.totalorder %s27, 0
      %p84 = por %p82, %p83
      %p85 = scmp.ne.s32.totalorder %s77, %s79
      %p86 = scmp.eq.s32.totalorder %s32, 1
      %p87 = por %p85, %p86
      %p88 = scmp.ne.s32.totalorder %s79, %s80
      %p89 = scmp.eq.s32.totalorder %s32, 0
      %p90 = por %p88, %p89
      %p91 = scmp.ne.s32.totalorder %s79, %s80
      %p92 = scmp.eq.s32.totalorder %s33, 1
      %p93 = por %p91, %p92
      %p95 = scmp.ne.s32.totalorder %s80, %s94
      %p96 = scmp.eq.s32.totalorder %s33, 0
      %p97 = por %p95, %p96
      %s99 = sadd.s32 %s98, 1
      %p102 = scmp.eq.s32.totalorder %s27, 1
      %p103 = scmp.ne.s32.totalorder %s98, %s100
      %p104 = scmp.eq.s32.totalorder %s27, 0
      %p105 = por %p103, %p104
      %p106 = scmp.ne.s32.totalorder %s98, %s100
      %p107 = scmp.eq.s32.totalorder %s32, 1
      %p108 = por %p106, %p107
      %p109 = scmp.ne.s32.totalorder %s100, %s101
      %p110 = scmp.eq.s32.totalorder %s32, 0
      %p111 = por %p109, %p110
      %p112 = scmp.ne.s32.totalorder %s100, %s101
      %p113 = scmp.eq.s32.totalorder %s33, 1
      %p114 = por %p112, %p113
      %p116 = scmp.ne.s32.totalorder %s101, %s115
      %p117 = scmp.eq.s32.totalorder %s33, 0
      %p118 = por %p116, %p117
      %s119 = ssub.s32 %s27, %s34
      %p120 = scmp.eq.s32.totalorder %s119, 0
      %s122 = sadd.s32 %s121, 1
      %s123 = scalar_select %p120, %s121, %s122
      %p126 = pneg %p120
      %p127 = scmp.eq.s32.totalorder %s27, 1
      %p128 = por %p126, %p127
      %p129 = scmp.ne.s32.totalorder %s121, %s124
      %p130 = scmp.eq.s32.totalorder %s27, 0
      %p131 = por %p129, %p130
      %p132 = scmp.ne.s32.totalorder %s121, %s124
      %p133 = scmp.eq.s32.totalorder %s32, 1
      %p134 = por %p132, %p133
      %p135 = scmp.ne.s32.totalorder %s124, %s125
      %p136 = scmp.eq.s32.totalorder %s32, 0
      %p137 = por %p135, %p136
      %p138 = scmp.ne.s32.totalorder %s124, %s125
      %p139 = scmp.eq.s32.totalorder %s33, 1
      %p140 = por %p138, %p139
      %p142 = scmp.ne.s32.totalorder %s125, %s141
      %p143 = scmp.eq.s32.totalorder %s33, 0
      %p144 = por %p142, %p143
      %s145 = ssub.s32 %s27, %s34
      %p146 = scmp.eq.s32.totalorder %s145, 0
      %s148 = sadd.s32 %s147, 1
      %s149 = scalar_select %p146, %s147, %s148
      %p152 = pneg %p146
      %p153 = scmp.eq.s32.totalorder %s27, 1
      %p154 = por %p152, %p153
      %p155 = scmp.ne.s32.totalorder %s147, %s150
      %p156 = scmp.eq.s32.totalorder %s27, 0
      %p157 = por %p155, %p156
      %p158 = scmp.ne.s32.totalorder %s147, %s150
      %p159 = scmp.eq.s32.totalorder %s32, 1
      %p160 = por %p158, %p159
      %p161 = scmp.ne.s32.totalorder %s150, %s151
      %p162 = scmp.eq.s32.totalorder %s32, 0
      %p163 = por %p161, %p162
      %p164 = scmp.ne.s32.totalorder %s150, %s151
      %p165 = scmp.eq.s32.totalorder %s33, 1
      %p166 = por %p164, %p165
      %p168 = scmp.ne.s32.totalorder %s151, %s167
      %p169 = scmp.eq.s32.totalorder %s33, 0
      %p170 = por %p168, %p169
      %s171 = ssub.s32 %s27, %s34
      %p172 = scmp.eq.s32.totalorder %s171, 0
      %s174 = sadd.s32 %s173, 1
      %s175 = scalar_select %p172, %s173, %s174
      %p178 = pneg %p172
      %p179 = scmp.eq.s32.totalorder %s27, 1
      %p180 = por %p178, %p179
      %p181 = scmp.ne.s32.totalorder %s173, %s176
      %p182 = scmp.eq.s32.totalorder %s27, 0
      %p183 = por %p181, %p182
      %p184 = scmp.ne.s32.totalorder %s173, %s176
      %p185 = scmp.eq.s32.totalorder %s32, 1
      %p186 = por %p184, %p185
      %p187 = scmp.ne.s32.totalorder %s176, %s177
      %p188 = scmp.eq.s32.totalorder %s32, 0
      %p189 = por %p187, %p188
      %p190 = scmp.ne.s32.totalorder %s176, %s177
      %p191 = scmp.eq.s32.totalorder %s33, 1
      %p192 = por %p190, %p191
      %p194 = scmp.ne.s32.totalorder %s177, %s193
      %p195 = scmp.eq.s32.totalorder %s33, 0
      %p196 = por %p194, %p195
      %s197 = ssub.s32 %s27, %s34
      %p198 = scmp.eq.s32.totalorder %s197, 0
      %s200 = sadd.s32 %s199, 1
      %s201 = scalar_select %p198, %s199, %s200
      %p204 = pneg %p198
      %p205 = scmp.eq.s32.totalorder %s27, 1
      %p206 = por %p204, %p205
      %p207 = scmp.ne.s32.totalorder %s199, %s202
      %p208 = scmp.eq.s32.totalorder %s27, 0
      %p209 = por %p207, %p208
      %p210 = scmp.ne.s32.totalorder %s199, %s202
      %p211 = scmp.eq.s32.totalorder %s32, 1
      %p212 = por %p210, %p211
      %p213 = scmp.ne.s32.totalorder %s202, %s203
      %p214 = scmp.eq.s32.totalorder %s32, 0
      %p215 = por %p213, %p214
      %p216 = scmp.ne.s32.totalorder %s202, %s203
      %p217 = scmp.eq.s32.totalorder %s33, 1
      %p218 = por %p216, %p217
      %p220 = scmp.ne.s32.totalorder %s203, %s219
      %p221 = scmp.eq.s32.totalorder %s33, 0
      %p222 = por %p220, %p221
      %s223 = ssub.s32 %s27, %s34
      %p224 = scmp.eq.s32.totalorder %s223, 0
      %s226 = sadd.s32 %s225, 1
      %s227 = scalar_select %p224, %s225, %s226
      %p230 = pneg %p224
      %p231 = scmp.eq.s32.totalorder %s27, 1
      %p232 = por %p230, %p231
      %p233 = scmp.ne.s32.totalorder %s225, %s228
      %p234 = scmp.eq.s32.totalorder %s27, 0
      %p235 = por %p233, %p234
      %p236 = scmp.ne.s32.totalorder %s225, %s228
      %p237 = scmp.eq.s32.totalorder %s32, 1
      %p238 = por %p236, %p237
      %p239 = scmp.ne.s32.totalorder %s228, %s229
      %p240 = scmp.eq.s32.totalorder %s32, 0
      %p241 = por %p239, %p240
      %p242 = scmp.ne.s32.totalorder %s228, %s229
      %p243 = scmp.eq.s32.totalorder %s33, 1
      %p244 = por %p242, %p243
      %p246 = scmp.ne.s32.totalorder %s229, %s245
      %p247 = scmp.eq.s32.totalorder %s33, 0
      %p248 = por %p246, %p247
      %s249 = ssub.s32 %s27, %s34
      %p250 = scmp.eq.s32.totalorder %s249, 0
      %s252 = sadd.s32 %s251, 1
      %s253 = scalar_select %p250, %s251, %s252
      %p256 = pneg %p250
      %p257 = scmp.eq.s32.totalorder %s27, 1
      %p258 = por %p256, %p257
      %p259 = scmp.ne.s32.totalorder %s251, %s254
      %p260 = scmp.eq.s32.totalorder %s27, 0
      %p261 = por %p259, %p260
      %p262 = scmp.ne.s32.totalorder %s251, %s254
      %p263 = scmp.eq.s32.totalorder %s32, 1
      %p264 = por %p262, %p263
      %p265 = scmp.ne.s32.totalorder %s254, %s255
      %p266 = scmp.eq.s32.totalorder %s32, 0
      %p267 = por %p265, %p266
      %p268 = scmp.ne.s32.totalorder %s254, %s255
      %p269 = scmp.eq.s32.totalorder %s33, 1
      %p270 = por %p268, %p269
      %p272 = scmp.ne.s32.totalorder %s255, %s271
      %p273 = scmp.eq.s32.totalorder %s33, 0
      %p274 = por %p272, %p273
      %s275 = ssub.s32 %s27, %s34
      %p276 = scmp.eq.s32.totalorder %s275, 0
      %s278 = sadd.s32 %s277, 1
      %s279 = scalar_select %p276, %s277, %s278
      %p282 = pneg %p276
      %p283 = scmp.eq.s32.totalorder %s27, 1
      %p284 = por %p282, %p283
      %p285 = scmp.ne.s32.totalorder %s277, %s280
      %p286 = scmp.eq.s32.totalorder %s27, 0
      %p287 = por %p285, %p286
      %p288 = scmp.ne.s32.totalorder %s277, %s280
      %p289 = scmp.eq.s32.totalorder %s32, 1
      %p290 = por %p288, %p289
      %p291 = scmp.ne.s32.totalorder %s280, %s281
      %p292 = scmp.eq.s32.totalorder %s32, 0
      %p293 = por %p291, %p292
      %p294 = scmp.ne.s32.totalorder %s280, %s281
      %p295 = scmp.eq.s32.totalorder %s33, 1
      %p296 = por %p294, %p295
      %p298 = scmp.ne.s32.totalorder %s281, %s297
      %p299 = scmp.eq.s32.totalorder %s33, 0
      %p300 = por %p298, %p299
      %s301 = ssub.s32 %s27, %s34
      %p302 = scmp.eq.s32.totalorder %s301, 0
      %s304 = sadd.s32 %s303, 1
      %s305 = scalar_select %p302, %s303, %s304
      %p308 = pneg %p302
      %p309 = scmp.eq.s32.totalorder %s27, 1
      %p310 = por %p308, %p309
      %p311 = scmp.ne.s32.totalorder %s303, %s306
      %p312 = scmp.eq.s32.totalorder %s27, 0
      %p313 = por %p311, %p312
      %p314 = scmp.ne.s32.totalorder %s303, %s306
      %p315 = scmp.eq.s32.totalorder %s32, 1
      %p316 = por %p314, %p315
      %p317 = scmp.ne.s32.totalorder %s306, %s307
      %p318 = scmp.eq.s32.totalorder %s32, 0
      %p319 = por %p317, %p318
      %p320 = scmp.ne.s32.totalorder %s306, %s307
      %p321 = scmp.eq.s32.totalorder %s33, 1
      %p322 = por %p320, %p321
      %p324 = scmp.ne.s32.totalorder %s307, %s323
      %p325 = scmp.eq.s32.totalorder %s33, 0
      %p326 = por %p324, %p325
      %s327 = ssub.s32 %s27, %s34
      %p328 = scmp.eq.s32.totalorder %s327, 0
      %s330 = sadd.s32 %s329, 1
      %s331 = scalar_select %p328, %s329, %s330
      %p334 = pneg %p328
      %p335 = scmp.eq.s32.totalorder %s27, 1
      %p336 = por %p334, %p335
      %p337 = scmp.ne.s32.totalorder %s329, %s332
      %p338 = scmp.eq.s32.totalorder %s27, 0
      %p339 = por %p337, %p338
      %p340 = scmp.ne.s32.totalorder %s329, %s332
      %p341 = scmp.eq.s32.totalorder %s32, 1
      %p342 = por %p340, %p341
      %p343 = scmp.ne.s32.totalorder %s332, %s333
      %p344 = scmp.eq.s32.totalorder %s32, 0
      %p345 = por %p343, %p344
      %p346 = scmp.ne.s32.totalorder %s332, %s333
      %p347 = scmp.eq.s32.totalorder %s33, 1
      %p348 = por %p346, %p347
      %p350 = scmp.ne.s32.totalorder %s333, %s349
      %p351 = scmp.eq.s32.totalorder %s33, 0
      %p352 = por %p350, %p351
      %s353 = ssub.s32 %s27, %s34
      %p354 = scmp.eq.s32.totalorder %s353, 0
      %s356 = sadd.s32 %s355, 1
      %s357 = scalar_select %p354, %s355, %s356
      %p360 = pneg %p354
      %p361 = scmp.eq.s32.totalorder %s27, 1
      %p362 = por %p360, %p361
      %p363 = scmp.ne.s32.totalorder %s355, %s358
      %p364 = scmp.eq.s32.totalorder %s27, 0
      %p365 = por %p363, %p364
      %p366 = scmp.ne.s32.totalorder %s355, %s358
      %p367 = scmp.eq.s32.totalorder %s32, 1
      %p368 = por %p366, %p367
      %p369 = scmp.ne.s32.totalorder %s358, %s359
      %p370 = scmp.eq.s32.totalorder %s32, 0
      %p371 = por %p369, %p370
      %p372 = scmp.ne.s32.totalorder %s358, %s359
      %p373 = scmp.eq.s32.totalorder %s33, 1
      %p374 = por %p372, %p373
      %p376 = scmp.ne.s32.totalorder %s359, %s375
      %p377 = scmp.eq.s32.totalorder %s33, 0
      %p378 = por %p376, %p377
      %s379 = ssub.s32 %s27, %s34
      %p380 = scmp.eq.s32.totalorder %s379, 0
      %s382 = sadd.s32 %s381, 1
      %s383 = scalar_select %p380, %s381, %s382
      %p386 = pneg %p380
      %p387 = scmp.eq.s32.totalorder %s27, 1
      %p388 = por %p386, %p387
      %p389 = scmp.ne.s32.totalorder %s381, %s384
      %p390 = scmp.eq.s32.totalorder %s27, 0
      %p391 = por %p389, %p390
      %p392 = scmp.ne.s32.totalorder %s381, %s384
      %p393 = scmp.eq.s32.totalorder %s32, 1
      %p394 = por %p392, %p393
      %p395 = scmp.ne.s32.totalorder %s384, %s385
      %p396 = scmp.eq.s32.totalorder %s32, 0
      %p397 = por %p395, %p396
      %p398 = scmp.ne.s32.totalorder %s384, %s385
      %p399 = scmp.eq.s32.totalorder %s33, 1
      %p400 = por %p398, %p399
      %p402 = scmp.ne.s32.totalorder %s385, %s401
      %p403 = scmp.eq.s32.totalorder %s33, 0
      %p404 = por %p402, %p403
      %s405 = ssub.s32 %s27, %s34
      %p406 = scmp.eq.s32.totalorder %s405, 0
      %s408 = sadd.s32 %s407, 1
      %s409 = scalar_select %p406, %s407, %s408
      %p412 = pneg %p406
      %p413 = scmp.eq.s32.totalorder %s27, 1
      %p414 = por %p412, %p413
      %p415 = scmp.ne.s32.totalorder %s407, %s410
      %p416 = scmp.eq.s32.totalorder %s27, 0
      %p417 = por %p415, %p416
      %p418 = scmp.ne.s32.totalorder %s407, %s410
      %p419 = scmp.eq.s32.totalorder %s32, 1
      %p420 = por %p418, %p419
      %p421 = scmp.ne.s32.totalorder %s410, %s411
      %p422 = scmp.eq.s32.totalorder %s32, 0
      %p423 = por %p421, %p422
      %p424 = scmp.ne.s32.totalorder %s410, %s411
      %p425 = scmp.eq.s32.totalorder %s33, 1
      %p426 = por %p424, %p425
      %p428 = scmp.ne.s32.totalorder %s411, %s427
      %p429 = scmp.eq.s32.totalorder %s33, 0
      %p430 = por %p428, %p429
      %s431 = ssub.s32 %s27, %s34
      %p432 = scmp.eq.s32.totalorder %s431, 0
      %s434 = sadd.s32 %s433, 1
      %s435 = scalar_select %p432, %s433, %s434
      %p438 = pneg %p432
      %p439 = scmp.eq.s32.totalorder %s27, 1
      %p440 = por %p438, %p439
      %p441 = scmp.ne.s32.totalorder %s433, %s436
      %p442 = scmp.eq.s32.totalorder %s27, 0
      %p443 = por %p441, %p442
      %p444 = scmp.ne.s32.totalorder %s433, %s436
      %p445 = scmp.eq.s32.totalorder %s32, 1
      %p446 = por %p444, %p445
      %p447 = scmp.ne.s32.totalorder %s436, %s437
      %p448 = scmp.eq.s32.totalorder %s32, 0
      %p449 = por %p447, %p448
      %p450 = scmp.ne.s32.totalorder %s436, %s437
      %p451 = scmp.eq.s32.totalorder %s33, 1
      %p452 = por %p450, %p451
      %p454 = scmp.ne.s32.totalorder %s437, %s453
      %p455 = scmp.eq.s32.totalorder %s33, 0
      %p456 = por %p454, %p455
      %s457 = ssub.s32 %s27, %s34
      %p458 = scmp.eq.s32.totalorder %s457, 0
      %s460 = sadd.s32 %s459, 1
      %s461 = scalar_select %p458, %s459, %s460
      %p464 = pneg %p458
      %p465 = scmp.eq.s32.totalorder %s27, 1
      %p466 = por %p464, %p465
      %p467 = scmp.ne.s32.totalorder %s459, %s462
      %p468 = scmp.eq.s32.totalorder %s27, 0
      %p469 = por %p467, %p468
      %p470 = scmp.ne.s32.totalorder %s459, %s462
      %p471 = scmp.eq.s32.totalorder %s32, 1
      %p472 = por %p470, %p471
      %p473 = scmp.ne.s32.totalorder %s462, %s463
      %p474 = scmp.eq.s32.totalorder %s32, 0
      %p475 = por %p473, %p474
      %p476 = scmp.ne.s32.totalorder %s462, %s463
      %p477 = scmp.eq.s32.totalorder %s33, 1
      %p478 = por %p476, %p477
      %p480 = scmp.ne.s32.totalorder %s463, %s479
      %p481 = scmp.eq.s32.totalorder %s33, 0
      %p482 = por %p480, %p481
      %s483 = ssub.s32 %s27, %s34
      %p484 = scmp.eq.s32.totalorder %s483, 0
      %s486 = sadd.s32 %s485, 1
      %s487 = scalar_select %p484, %s485, %s486
      %p490 = pneg %p484
      %p491 = scmp.eq.s32.totalorder %s27, 1
      %p492 = por %p490, %p491
      %p493 = scmp.ne.s32.totalorder %s485, %s488
      %p494 = scmp.eq.s32.totalorder %s27, 0
      %p495 = por %p493, %p494
      %p496 = scmp.ne.s32.totalorder %s485, %s488
      %p497 = scmp.eq.s32.totalorder %s32, 1
      %p498 = por %p496, %p497
      %p499 = scmp.ne.s32.totalorder %s488, %s489
      %p500 = scmp.eq.s32.totalorder %s32, 0
      %p501 = por %p499, %p500
      %p502 = scmp.ne.s32.totalorder %s488, %s489
      %p503 = scmp.eq.s32.totalorder %s33, 1
      %p504 = por %p502, %p503
      %p506 = scmp.ne.s32.totalorder %s489, %s505
      %p507 = scmp.eq.s32.totalorder %s33, 0
      %p508 = por %p506, %p507
      %s509 = ssub.s32 %s27, %s34
      %p510 = scmp.eq.s32.totalorder %s509, 0
      %s512 = sadd.s32 %s511, 1
      %s513 = scalar_select %p510, %s511, %s512
      %p516 = pneg %p510
      %p517 = scmp.eq.s32.totalorder %s27, 1
      %p518 = por %p516, %p517
      %p519 = scmp.ne.s32.totalorder %s511, %s514
      %p520 = scmp.eq.s32.totalorder %s27, 0
      %p521 = por %p519, %p520
      %p522 = scmp.ne.s32.totalorder %s511, %s514
      %p523 = scmp.eq.s32.totalorder %s32, 1
      %p524 = por %p522, %p523
      %p525 = scmp.ne.s32.totalorder %s514, %s515
      %p526 = scmp.eq.s32.totalorder %s32, 0
      %p527 = por %p525, %p526
      %p528 = scmp.ne.s32.totalorder %s514, %s515
      %p529 = scmp.eq.s32.totalorder %s33, 1
      %p530 = por %p528, %p529
      %p532 = scmp.ne.s32.totalorder %s515, %s531
      %p533 = scmp.eq.s32.totalorder %s33, 0
      %p534 = por %p532, %p533
      %s536 = sadd.s32 %s535, 1
      %p539 = scmp.eq.s32.totalorder %s27, 1
      %p540 = scmp.ne.s32.totalorder %s535, %s537
      %p541 = scmp.eq.s32.totalorder %s27, 0
      %p542 = por %p540, %p541
      %p543 = scmp.ne.s32.totalorder %s535, %s537
      %p544 = scmp.eq.s32.totalorder %s32, 1
      %p545 = por %p543, %p544
      %p546 = scmp.ne.s32.totalorder %s537, %s538
      %p547 = scmp.eq.s32.totalorder %s32, 0
      %p548 = por %p546, %p547
      %p549 = scmp.ne.s32.totalorder %s537, %s538
      %p550 = scmp.eq.s32.totalorder %s33, 1
      %p551 = por %p549, %p550
      %p553 = scmp.ne.s32.totalorder %s538, %s552
      %p554 = scmp.eq.s32.totalorder %s33, 0
      %p555 = por %p553, %p554
      %p556 = scmp.le.s32.totalorder 1, %s27
      %p557 = scmp.lt.s32.totalorder %s27, 3
      %p558 = pnand %p556, %p557
      %p559 = pneg %p558
      // Predicated region
      $region9: #{tpu_custom_call.1} parent=5 // pred_check
        _
      $region10: #{tpu_custom_call.1} parent=5 // pred_check_branch
        %561 = sbr.rel (%p558) target = $region12
      $region11: #{tpu_custom_call.1} parent=5 // pred_region
        %s562 = ssub.s32 %s27, 1
        // Predicated region
        $region13: #{tpu_custom_call.1} parent=11 // pred_check
          %p563 = pneg %p48
        $region14: #{tpu_custom_call.1} parent=11 // pred_check_branch
          %565 = sbr.rel (%p563) target = $region16
        $region15: #{tpu_custom_call.1} parent=11 // pred_region
          _
        $region16: #{tpu_custom_call.1} parent=11 // pred_fallthru
          _
        // Predicated region
        $region17: #{tpu_custom_call.1} parent=11 // pred_check
          %p566 = pneg %p69
        $region18: #{tpu_custom_call.1} parent=11 // pred_check_branch
          %568 = sbr.rel (%p566) target = $region20
        $region19: #{tpu_custom_call.1} parent=11 // pred_region
          _
        $region20: #{tpu_custom_call.1} parent=11 // pred_fallthru
          _
        // Predicated region
        $region21: #{tpu_custom_call.1} parent=11 // pred_check
          %p569 = pneg %p90
        $region22: #{tpu_custom_call.1} parent=11 // pred_check_branch
          %571 = sbr.rel (%p569) target = $region24
        $region23: #{tpu_custom_call.1} parent=11 // pred_region
          _
        $region24: #{tpu_custom_call.1} parent=11 // pred_fallthru
          _
        // Predicated region
        $region25: #{tpu_custom_call.1} parent=11 // pred_check
          %p572 = pneg %p111
        $region26: #{tpu_custom_call.1} parent=11 // pred_check_branch
          %574 = sbr.rel (%p572) target = $region28
        $region27: #{tpu_custom_call.1} parent=11 // pred_region
          _
        $region28: #{tpu_custom_call.1} parent=11 // pred_fallthru
          _
      $region12: #{tpu_custom_call.1} parent=5 // pred_fallthru
        _
      %p575 = scmp.lt.s32.totalorder %s27, 2
      // Predicated region
      $region29: #{tpu_custom_call.1} parent=5 // pred_check
        %p576 = pneg %p575
      $region30: #{tpu_custom_call.1} parent=5 // pred_check_branch
        %578 = sbr.rel (%p576) target = $region32
      $region31: #{tpu_custom_call.1} parent=5 // pred_region
        // Predicated region
        $region33: #{tpu_custom_call.1} parent=31 // pred_check
          %p579 = pneg %p131
        $region34: #{tpu_custom_call.1} parent=31 // pred_check_branch
          %581 = sbr.rel (%p579) target = $region36
        $region35: #{tpu_custom_call.1} parent=31 // pred_region
          %p582 = scmp.lt.s32.totalorder %s27, 1
          %s583 = scalar_select %p582, %s27, 1
          %s584 = smul.addr %s583, 8
          %s585 = smul.addr %s584, 4
          %s586 = scalar_lea.vmem %s4, %s585
        $region36: #{tpu_custom_call.1} parent=31 // pred_fallthru
          _
        // Predicated region
        $region37: #{tpu_custom_call.1} parent=31 // pred_check
          %p587 = pneg %p157
        $region38: #{tpu_custom_call.1} parent=31 // pred_check_branch
          %589 = sbr.rel (%p587) target = $region40
        $region39: #{tpu_custom_call.1} parent=31 // pred_region
          %p590 = scmp.lt.s32.totalorder %s27, 1
          %s591 = scalar_select %p590, %s27, 1
          %s592 = smul.addr %s591, 2
          %s593 = scalar_lea.vmem %s5, %s592
        $region40: #{tpu_custom_call.1} parent=31 // pred_fallthru
          _
        // Predicated region
        $region41: #{tpu_custom_call.1} parent=31 // pred_check
          %p594 = pneg %p183
        $region42: #{tpu_custom_call.1} parent=31 // pred_check_branch
          %596 = sbr.rel (%p594) target = $region44
        $region43: #{tpu_custom_call.1} parent=31 // pred_region
          %p597 = scmp.lt.s32.totalorder %s27, 1
          %s598 = scalar_select %p597, %s27, 1
          %s599 = smul.addr %s598, 8
          %s600 = smul.addr %s599, 4
          %s601 = scalar_lea.vmem %s6, %s600
        $region44: #{tpu_custom_call.1} parent=31 // pred_fallthru
          _
        // Predicated region
        $region45: #{tpu_custom_call.1} parent=31 // pred_check
          %p602 = pneg %p209
        $region46: #{tpu_custom_call.1} parent=31 // pred_check_branch
          %604 = sbr.rel (%p602) target = $region48
        $region47: #{tpu_custom_call.1} parent=31 // pred_region
          %p605 = scmp.lt.s32.totalorder %s27, 1
          %s606 = scalar_select %p605, %s27, 1
          %s607 = smul.addr %s606, 2
          %s608 = scalar_lea.vmem %s7, %s607
        $region48: #{tpu_custom_call.1} parent=31 // pred_fallthru
          _
        // Predicated region
        $region49: #{tpu_custom_call.1} parent=31 // pred_check
          %p609 = pneg %p235
        $region50: #{tpu_custom_call.1} parent=31 // pred_check_branch
          %611 = sbr.rel (%p609) target = $region52
        $region51: #{tpu_custom_call.1} parent=31 // pred_region
          %p612 = scmp.lt.s32.totalorder %s27, 1
          %s613 = scalar_select %p612, %s27, 1
          %s614 = smul.addr %s613, 8
          %s615 = smul.addr %s614, 4
          %s616 = scalar_lea.vmem %s8, %s615
        $region52: #{tpu_custom_call.1} parent=31 // pred_fallthru
          _
        // Predicated region
        $region53: #{tpu_custom_call.1} parent=31 // pred_check
          %p617 = pneg %p261
        $region54: #{tpu_custom_call.1} parent=31 // pred_check_branch
          %619 = sbr.rel (%p617) target = $region56
        $region55: #{tpu_custom_call.1} parent=31 // pred_region
          %p620 = scmp.lt.s32.totalorder %s27, 1
          %s621 = scalar_select %p620, %s27, 1
          %s622 = smul.addr %s621, 2
          %s623 = scalar_lea.vmem %s9, %s622
        $region56: #{tpu_custom_call.1} parent=31 // pred_fallthru
          _
        // Predicated region
        $region57: #{tpu_custom_call.1} parent=31 // pred_check
          %p624 = pneg %p287
        $region58: #{tpu_custom_call.1} parent=31 // pred_check_branch
          %626 = sbr.rel (%p624) target = $region60
        $region59: #{tpu_custom_call.1} parent=31 // pred_region
          %p627 = scmp.lt.s32.totalorder %s27, 1
          %s628 = scalar_select %p627, %s27, 1
          %s629 = smul.addr %s628, 4
          %s630 = smul.addr %s629, 4
          %s631 = scalar_lea.vmem %s10, %s630
        $region60: #{tpu_custom_call.1} parent=31 // pred_fallthru
          _
        // Predicated region
        $region61: #{tpu_custom_call.1} parent=31 // pred_check
          %p632 = pneg %p313
        $region62: #{tpu_custom_call.1} parent=31 // pred_check_branch
          %634 = sbr.rel (%p632) target = $region64
        $region63: #{tpu_custom_call.1} parent=31 // pred_region
          %p635 = scmp.lt.s32.totalorder %s27, 1
          %s636 = scalar_select %p635, %s27, 1
          %s637 = scalar_lea.vmem %s11, %s636
        $region64: #{tpu_custom_call.1} parent=31 // pred_fallthru
          _
        // Predicated region
        $region65: #{tpu_custom_call.1} parent=31 // pred_check
          %p638 = pneg %p339
        $region66: #{tpu_custom_call.1} parent=31 // pred_check_branch
          %640 = sbr.rel (%p638) target = $region68
        $region67: #{tpu_custom_call.1} parent=31 // pred_region
          %p641 = scmp.lt.s32.totalorder %s27, 1
          %s642 = scalar_select %p641, %s27, 1
          %s643 = scalar_lea.vmem %s12, %s642
        $region68: #{tpu_custom_call.1} parent=31 // pred_fallthru
          _
        // Predicated region
        $region69: #{tpu_custom_call.1} parent=31 // pred_check
          %p644 = pneg %p365
        $region70: #{tpu_custom_call.1} parent=31 // pred_check_branch
          %646 = sbr.rel (%p644) target = $region72
        $region71: #{tpu_custom_call.1} parent=31 // pred_region
          %p647 = scmp.lt.s32.totalorder %s27, 1
          %s648 = scalar_select %p647, %s27, 1
          %s649 = scalar_lea.vmem %s13, %s648
        $region72: #{tpu_custom_call.1} parent=31 // pred_fallthru
          _
        // Predicated region
        $region73: #{tpu_custom_call.1} parent=31 // pred_check
          %p650 = pneg %p391
        $region74: #{tpu_custom_call.1} parent=31 // pred_check_branch
          %652 = sbr.rel (%p650) target = $region76
        $region75: #{tpu_custom_call.1} parent=31 // pred_region
          %p653 = scmp.lt.s32.totalorder %s27, 1
          %s654 = scalar_select %p653, %s27, 1
          %s655 = smul.addr %s654, 4
          %s656 = smul.addr %s655, 4
          %s657 = scalar_lea.vmem %s14, %s656
        $region76: #{tpu_custom_call.1} parent=31 // pred_fallthru
          _
        // Predicated region
        $region77: #{tpu_custom_call.1} parent=31 // pred_check
          %p658 = pneg %p417
        $region78: #{tpu_custom_call.1} parent=31 // pred_check_branch
          %660 = sbr.rel (%p658) target = $region80
        $region79: #{tpu_custom_call.1} parent=31 // pred_region
          %p661 = scmp.lt.s32.totalorder %s27, 1
          %s662 = scalar_select %p661, %s27, 1
          %s663 = scalar_lea.vmem %s15, %s662
        $region80: #{tpu_custom_call.1} parent=31 // pred_fallthru
          _
        // Predicated region
        $region81: #{tpu_custom_call.1} parent=31 // pred_check
          %p664 = pneg %p443
        $region82: #{tpu_custom_call.1} parent=31 // pred_check_branch
          %666 = sbr.rel (%p664) target = $region84
        $region83: #{tpu_custom_call.1} parent=31 // pred_region
          %p667 = scmp.lt.s32.totalorder %s27, 1
          %s668 = scalar_select %p667, %s27, 1
          %s669 = smul.addr %s668, 16
          %s670 = smul.addr %s669, 4
          %s671 = scalar_lea.vmem %s16, %s670
        $region84: #{tpu_custom_call.1} parent=31 // pred_fallthru
          _
        // Predicated region
        $region85: #{tpu_custom_call.1} parent=31 // pred_check
          %p672 = pneg %p469
        $region86: #{tpu_custom_call.1} parent=31 // pred_check_branch
          %674 = sbr.rel (%p672) target = $region88
        $region87: #{tpu_custom_call.1} parent=31 // pred_region
          %p675 = scmp.lt.s32.totalorder %s27, 1
          %s676 = scalar_select %p675, %s27, 1
          %s677 = scalar_lea.vmem %s17, %s676
        $region88: #{tpu_custom_call.1} parent=31 // pred_fallthru
          _
        // Predicated region
        $region89: #{tpu_custom_call.1} parent=31 // pred_check
          %p678 = pneg %p495
        $region90: #{tpu_custom_call.1} parent=31 // pred_check_branch
          %680 = sbr.rel (%p678) target = $region92
        $region91: #{tpu_custom_call.1} parent=31 // pred_region
          %p681 = scmp.lt.s32.totalorder %s27, 1
          %s682 = scalar_select %p681, %s27, 1
          %s683 = scalar_lea.vmem %s18, %s682
        $region92: #{tpu_custom_call.1} parent=31 // pred_fallthru
          _
        // Predicated region
        $region93: #{tpu_custom_call.1} parent=31 // pred_check
          %p684 = pneg %p521
        $region94: #{tpu_custom_call.1} parent=31 // pred_check_branch
          %686 = sbr.rel (%p684) target = $region96
        $region95: #{tpu_custom_call.1} parent=31 // pred_region
          %p687 = scmp.lt.s32.totalorder %s27, 1
          %s688 = scalar_select %p687, %s27, 1
          %s689 = scalar_lea.vmem %s19, %s688
        $region96: #{tpu_custom_call.1} parent=31 // pred_fallthru
          _
      $region32: #{tpu_custom_call.1} parent=5 // pred_fallthru
        _
      %p690 = scmp.le.s32.totalorder 1, %s27
      %p691 = scmp.lt.s32.totalorder %s27, 3
      %p692 = pnand %p690, %p691
      %p693 = pneg %p692
      // Predicated region
      $region97: #{tpu_custom_call.1} parent=5 // pred_check
        _
      $region98: #{tpu_custom_call.1} parent=5 // pred_check_branch
        %695 = sbr.rel (%p692) target = $region100
      $region99: #{tpu_custom_call.1} parent=5 // pred_region
        %s696 = ssub.s32 %s27, 1
        %p697 = pneg %p48
        %p698 = pneg %p45
        %p699 = pneg %p69
        %p700 = pneg %p66
        %p701 = pneg %p90
        %p702 = pneg %p87
        %p703 = pneg %p111
        %p704 = pneg %p108
        %p705 = scmp.lt.s32.totalorder %s32, 1
        %s706 = scalar_select %p705, %s32, 1
        %s707 = smul.addr %s706, 8
        %s708 = smul.addr %s707, 4
        %s709 = scalar_lea.vmem %s4, %s708
        %p710 = pneg %p137
        %p711 = pneg %p134
        %p712 = scmp.lt.s32.totalorder %s32, 1
        %s713 = scalar_select %p712, %s32, 1
        %s714 = smul.addr %s713, 2
        %s715 = scalar_lea.vmem %s5, %s714
        %p716 = pneg %p163
        %p717 = pneg %p160
        %p718 = scmp.lt.s32.totalorder %s32, 1
        %s719 = scalar_select %p718, %s32, 1
        %s720 = smul.addr %s719, 8
        %s721 = smul.addr %s720, 4
        %s722 = scalar_lea.vmem %s6, %s721
        %p723 = pneg %p189
        %p724 = pneg %p186
        %p725 = scmp.lt.s32.totalorder %s32, 1
        %s726 = scalar_select %p725, %s32, 1
        %s727 = smul.addr %s726, 2
        %s728 = scalar_lea.vmem %s7, %s727
        %p729 = pneg %p215
        %p730 = pneg %p212
        %p731 = scmp.lt.s32.totalorder %s32, 1
        %s732 = scalar_select %p731, %s32, 1
        %s733 = smul.addr %s732, 8
        %s734 = smul.addr %s733, 4
        %s735 = scalar_lea.vmem %s8, %s734
        %p736 = pneg %p241
        %p737 = pneg %p238
        %p738 = scmp.lt.s32.totalorder %s32, 1
        %s739 = scalar_select %p738, %s32, 1
        %s740 = smul.addr %s739, 2
        %s741 = scalar_lea.vmem %s9, %s740
        %p742 = pneg %p267
        %p743 = pneg %p264
        %p744 = scmp.lt.s32.totalorder %s32, 1
        %s745 = scalar_select %p744, %s32, 1
        %s746 = smul.addr %s745, 4
        %s747 = smul.addr %s746, 4
        %s748 = scalar_lea.vmem %s10, %s747
        %p749 = pneg %p293
        %p750 = pneg %p290
        %p751 = scmp.lt.s32.totalorder %s32, 1
        %s752 = scalar_select %p751, %s32, 1
        %s753 = scalar_lea.vmem %s11, %s752
        %p754 = pneg %p319
        %p755 = pneg %p316
        %p756 = scmp.lt.s32.totalorder %s32, 1
        %s757 = scalar_select %p756, %s32, 1
        %s758 = scalar_lea.vmem %s12, %s757
        %p759 = pneg %p345
        %p760 = pneg %p342
        %p761 = scmp.lt.s32.totalorder %s32, 1
        %s762 = scalar_select %p761, %s32, 1
        %s763 = scalar_lea.vmem %s13, %s762
        %p764 = pneg %p371
        %p765 = pneg %p368
        %p766 = scmp.lt.s32.totalorder %s32, 1
        %s767 = scalar_select %p766, %s32, 1
        %s768 = smul.addr %s767, 4
        %s769 = smul.addr %s768, 4
        %s770 = scalar_lea.vmem %s14, %s769
        %p771 = pneg %p397
        %p772 = pneg %p394
        %p773 = scmp.lt.s32.totalorder %s32, 1
        %s774 = scalar_select %p773, %s32, 1
        %s775 = scalar_lea.vmem %s15, %s774
        %p776 = pneg %p423
        %p777 = pneg %p420
        %p778 = scmp.lt.s32.totalorder %s32, 1
        %s779 = scalar_select %p778, %s32, 1
        %s780 = smul.addr %s779, 16
        %s781 = smul.addr %s780, 4
        %s782 = scalar_lea.vmem %s16, %s781
        %p783 = pneg %p449
        %p784 = pneg %p446
        %p785 = scmp.lt.s32.totalorder %s32, 1
        %s786 = scalar_select %p785, %s32, 1
        %s787 = scalar_lea.vmem %s17, %s786
        %p788 = pneg %p475
        %p789 = pneg %p472
        %p790 = scmp.lt.s32.totalorder %s32, 1
        %s791 = scalar_select %p790, %s32, 1
        %s792 = scalar_lea.vmem %s18, %s791
        %p793 = pneg %p501
        %p794 = pneg %p498
        %p795 = scmp.lt.s32.totalorder %s32, 1
        %s796 = scalar_select %p795, %s32, 1
        %s797 = scalar_lea.vmem %s19, %s796
        %p798 = pneg %p527
        %p799 = pneg %p524
        %p800 = pneg %p548
        %p801 = pneg %p545
        %p802 = scmp.lt.s32.totalorder %s32, 1
        %s803 = scalar_select %p802, %s32, 1
        %s804 = smul.addr %s803, 8
        %s805 = smul.addr %s804, 4
        %s806 = scalar_lea.vmem %s4, %s805
        %p807 = scmp.lt.s32.totalorder %s32, 1
        %s808 = scalar_select %p807, %s32, 1
        %s809 = smul.addr %s808, 2
        %s810 = scalar_lea.vmem %s5, %s809
        %p811 = scmp.lt.s32.totalorder %s32, 1
        %s812 = scalar_select %p811, %s32, 1
        %s813 = smul.addr %s812, 8
        %s814 = smul.addr %s813, 4
        %s815 = scalar_lea.vmem %s6, %s814
        %p816 = scmp.lt.s32.totalorder %s32, 1
        %s817 = scalar_select %p816, %s32, 1
        %s818 = smul.addr %s817, 2
        %s819 = scalar_lea.vmem %s7, %s818
        %p820 = scmp.lt.s32.totalorder %s32, 1
        %s821 = scalar_select %p820, %s32, 1
        %s822 = smul.addr %s821, 8
        %s823 = smul.addr %s822, 4
        %s824 = scalar_lea.vmem %s8, %s823
        %p825 = scmp.lt.s32.totalorder %s32, 1
        %s826 = scalar_select %p825, %s32, 1
        %s827 = smul.addr %s826, 2
        %s828 = scalar_lea.vmem %s9, %s827
        %p829 = scmp.lt.s32.totalorder %s32, 1
        %s830 = scalar_select %p829, %s32, 1
        %s831 = smul.addr %s830, 4
        %s832 = smul.addr %s831, 4
        %s833 = scalar_lea.vmem %s10, %s832
        %p834 = scmp.lt.s32.totalorder %s32, 1
        %s835 = scalar_select %p834, %s32, 1
        %s836 = scalar_lea.vmem %s11, %s835
        %p837 = scmp.lt.s32.totalorder %s32, 1
        %s838 = scalar_select %p837, %s32, 1
        %s839 = scalar_lea.vmem %s12, %s838
        %p840 = scmp.lt.s32.totalorder %s32, 1
        %s841 = scalar_select %p840, %s32, 1
        %s842 = scalar_lea.vmem %s13, %s841
        %p843 = scmp.lt.s32.totalorder %s32, 1
        %s844 = scalar_select %p843, %s32, 1
        %s845 = smul.addr %s844, 4
        %s846 = smul.addr %s845, 4
        %s847 = scalar_lea.vmem %s14, %s846
        %p848 = scmp.lt.s32.totalorder %s32, 1
        %s849 = scalar_select %p848, %s32, 1
        %s850 = scalar_lea.vmem %s15, %s849
        %p851 = scmp.lt.s32.totalorder %s32, 1
        %s852 = scalar_select %p851, %s32, 1
        %s853 = smul.addr %s852, 16
        %s854 = smul.addr %s853, 4
        %s855 = scalar_lea.vmem %s16, %s854
        %p856 = scmp.lt.s32.totalorder %s32, 1
        %s857 = scalar_select %p856, %s32, 1
        %s858 = scalar_lea.vmem %s17, %s857
        %p859 = scmp.lt.s32.totalorder %s32, 1
        %s860 = scalar_select %p859, %s32, 1
        %s861 = scalar_lea.vmem %s18, %s860
        %p862 = scmp.lt.s32.totalorder %s32, 1
        %s863 = scalar_select %p862, %s32, 1
        %s864 = scalar_lea.vmem %s19, %s863
        %p866 = scmp.eq.s32.totalorder %s32, 0
        // Predicated region
        $region101: #{tpu_custom_call.1} parent=99 // pred_check
          %p867 = pneg %p866
        $region102: #{tpu_custom_call.1} parent=99 // pred_check_branch
          %869 = sbr.rel (%p867) target = $region104
        $region103: #{tpu_custom_call.1} parent=99 // pred_region
          %v870 = vld [vmem:[%s0] sm:$0xff]
          %v871 = vld [vmem:[%s0 + $0x8] sm:$0xff]
          %v872 = vld [vmem:[%s2] sm:$0x1]
          %v873 = vld [vmem:[%s3] sm:$0x1]
          %vm874 = vcmask 261120
          %v875 = vsel %vm874, %v870, 0.0
          %876 = vadd.xlane.f32.xlu0 %v875
          %v877 = vpop.xlane.xlu0 %876
          %v878 = vsel %vm874, %v871, 0.0
          %879 = vadd.xlane.f32.xlu0 %v878
          %v880 = vpop.xlane.xlu0 %879
          %v881 = vrcp.pop 32.0
          %v882 = vmul.f32 %v877, %v881
          %v883 = vmul.f32 %v880, %v881
          %v884 = vsub.f32 %v870, %v882
          %v885 = vsub.f32 %v871, %v883
          %v886 = vmul.f32 %v884, %v884
          %v887 = vmul.f32 %v885, %v885
          %v888 = vsel %vm874, %v886, 0.0
          %889 = vadd.xlane.f32.xlu0 %v888
          %v890 = vpop.xlane.xlu0 %889
          %v891 = vsel %vm874, %v887, 0.0
          %892 = vadd.xlane.f32.xlu0 %v891
          %v893 = vpop.xlane.xlu0 %892
          %v894 = vmul.f32 %v890, %v881
          %v895 = vmul.f32 %v893, %v881
          %v896 = vadd.f32 %v894, 1e-12
          %v897 = vadd.f32 %v895, 1e-12
          %v898 = vrsqrt.pop %v896
          %v899 = vrsqrt.pop %v897
          %v900 = vmul.f32 %v884, %v898
          %v901 = vmul.f32 %v885, %v899
          %v903 = vlaneseq
          %v904 = vshrl.u32 %v903, 7
          %v905 = vsub.s32 0, %v904
          %v906 = vrot.slane %v872, %v905
          %v908 = vmul.f32 %v900, %v906
          %v909 = vmul.f32 %v901, %v906
          %v911 = vlaneseq
          %v912 = vshrl.u32 %v911, 7
          %v913 = vsub.s32 0, %v912
          %v914 = vrot.slane %v873, %v913
          %v916 = vadd.f32 %v908, %v914
          %v917 = vadd.f32 %v909, %v914
          %918 = vst.msk [vmem:[#allocation2] sm:$0xff] %vm874, %v916
          %919 = vst.msk [vmem:[#allocation2 + $0x8] sm:$0xff] %vm874, %v917
        $region104: #{tpu_custom_call.1} parent=99 // pred_fallthru
          _
        %v920 = vld [vmem:[#allocation2] sm:$0xff]
        %v921 = vld [vmem:[#allocation2 + $0x8] sm:$0xff]
        %v922 = vpack.c.bf16 %v921, %v920
        %v923 = vld [vmem:[%s1] sm:$0x1]
        %v924 = vld [vmem:[%s1 + $0x1] sm:$0x1]
        %v925 = vld [vmem:[%s806] sm:$0xf]
        %v926 = vld [vmem:[%s806 + $0x4] sm:$0xf]
        %v927 = vld [vmem:[%s806 + $0x8] sm:$0xf]
        %v928 = vld [vmem:[%s806 + $0xc] sm:$0xf]
        %v929 = vld [vmem:[%s810] sm:$0x1]
        %v931 = vlaneseq
        %v932 = vshrl.u32 %v931, 7
        %v933 = vsub.s32 0, %v932
        %v934 = vrot.slane %v929, %v933
        %v940 = vunpack.c.l.b16 %v925
        %v941 = vunpack.c.l.b16 %v926
        %v942 = vunpack.c.l.b16 %v927
        %v943 = vunpack.c.l.b16 %v928
        %v944 = vpack.c.b16 %v941, %v940
        %v945 = vpack.c.b16 %v943, %v942
        %vm948 = vcmask 261120
        %v950 = vsel %vm948, %v922, 0
        %952 = vmatprep.subr.bf16.mxu0 0
        %953 = vmatpush1.bf16.msra.mxu0 0
        %954 = vmatprep.subr.bf16.mxu0 0
        %955 = vmatpush1.bf16.msra.mxu0 0
        %956 = vmatprep.subr.bf16.mxu0 0
        %957 = vmatpush1.bf16.msra.mxu0 0
        %958 = vmatprep.subr.bf16.mxu0 0
        %959 = vmatpush1.bf16.msra.mxu0 0
        %960 = vmatprep.subr.bf16.mxu0 0
        %961 = vmatpush1.bf16.msra.mxu0 0
        %962 = vmatprep.subr.bf16.mxu0 0
        %963 = vmatpush1.bf16.msra.mxu0 0
        %964 = vmatprep.subr.bf16.mxu0 0
        %965 = vmatpush1.bf16.msra.mxu0 %v945
        %966 = vmatprep.subr.bf16.mxu0 0
        %967 = vmatpush1.bf16.msra.mxu0 %v944
        %968 = vmatprep.subr.bf16.mxu0 0
        %969 = vmatpush2.bf16.msra.mxu0 0
        %970 = vmatprep.subr.bf16.mxu0 0
        %971 = vmatpush2.bf16.msra.mxu0 0
        %972 = vmatprep.subr.bf16.mxu0 0
        %973 = vmatpush2.bf16.msra.mxu0 0
        %974 = vmatprep.subr.bf16.mxu0 0
        %975 = vmatpush2.bf16.msra.mxu0 0
        %976 = vmatprep.subr.bf16.mxu0 0
        %977 = vmatpush2.bf16.msra.mxu0 0
        %978 = vmatprep.subr.bf16.mxu0 0
        %979 = vmatpush2.bf16.msra.mxu0 0
        %980 = vmatprep.subr.bf16.mxu0 0
        %981 = vmatpush2.bf16.msra.mxu0 0
        %982 = vmatprep.subr.bf16.mxu0 0
        %983 = vmatpush2.bf16.msra.mxu0 0
        %984 = vmatprep.mubr.bf16.mxu0 0
        %985 = vmatmul.mubr.bf16.gmra.mxu0 %v950
        %v986 = vpop.f32.mrf.mxu0
        %v987 = vadd.f32 %v934, %v986
        %v988 = vpop.f32.mrf.mxu0
        %v989 = vpop.f32.mrf.mxu0
        %v990 = vadd.f32 %v934, %v989
        %v991 = vpop.f32.mrf.mxu0
        %992 = vdwg.mxu0
        %v993 = vmul.f32 %v987, 0.25
        %v994 = vmul.f32 %v990, 0.25
        %v995 = vld [vmem:[%s815] sm:$0xf]
        %v996 = vld [vmem:[%s815 + $0x4] sm:$0xf]
        %v997 = vld [vmem:[%s815 + $0x8] sm:$0xf]
        %v998 = vld [vmem:[%s815 + $0xc] sm:$0xf]
        %v999 = vld [vmem:[%s819] sm:$0x1]
        %v1001 = vlaneseq
        %v1002 = vshrl.u32 %v1001, 7
        %v1003 = vsub.s32 0, %v1002
        %v1004 = vrot.slane %v999, %v1003
        %v1010 = vunpack.c.l.b16 %v995
        %v1011 = vunpack.c.l.b16 %v996
        %v1012 = vunpack.c.l.b16 %v997
        %v1013 = vunpack.c.l.b16 %v998
        %v1014 = vpack.c.b16 %v1011, %v1010
        %v1015 = vpack.c.b16 %v1013, %v1012
        %1018 = vmatprep.subr.bf16.mxu0 0
        %1019 = vmatpush1.bf16.msra.mxu0 0
        %1020 = vmatprep.subr.bf16.mxu0 0
        %1021 = vmatpush1.bf16.msra.mxu0 0
        %1022 = vmatprep.subr.bf16.mxu0 0
        %1023 = vmatpush1.bf16.msra.mxu0 0
        %1024 = vmatprep.subr.bf16.mxu0 0
        %1025 = vmatpush1.bf16.msra.mxu0 0
        %1026 = vmatprep.subr.bf16.mxu0 0
        %1027 = vmatpush1.bf16.msra.mxu0 0
        %1028 = vmatprep.subr.bf16.mxu0 0
        %1029 = vmatpush1.bf16.msra.mxu0 0
        %1030 = vmatprep.subr.bf16.mxu0 0
        %1031 = vmatpush1.bf16.msra.mxu0 %v1015
        %1032 = vmatprep.subr.bf16.mxu0 0
        %1033 = vmatpush1.bf16.msra.mxu0 %v1014
        %1034 = vmatprep.subr.bf16.mxu0 0
        %1035 = vmatpush2.bf16.msra.mxu0 0
        %1036 = vmatprep.subr.bf16.mxu0 0
        %1037 = vmatpush2.bf16.msra.mxu0 0
        %1038 = vmatprep.subr.bf16.mxu0 0
        %1039 = vmatpush2.bf16.msra.mxu0 0
        %1040 = vmatprep.subr.bf16.mxu0 0
        %1041 = vmatpush2.bf16.msra.mxu0 0
        %1042 = vmatprep.subr.bf16.mxu0 0
        %1043 = vmatpush2.bf16.msra.mxu0 0
        %1044 = vmatprep.subr.bf16.mxu0 0
        %1045 = vmatpush2.bf16.msra.mxu0 0
        %1046 = vmatprep.subr.bf16.mxu0 0
        %1047 = vmatpush2.bf16.msra.mxu0 0
        %1048 = vmatprep.subr.bf16.mxu0 0
        %1049 = vmatpush2.bf16.msra.mxu0 0
        %1050 = vmatprep.mubr.bf16.mxu0 0
        %1051 = vmatmul.mubr.bf16.gmra.mxu0 %v950
        %v1052 = vpop.f32.mrf.mxu0
        %v1053 = vadd.f32 %v1004, %v1052
        %v1054 = vpop.f32.mrf.mxu0
        %v1055 = vpop.f32.mrf.mxu0
        %v1056 = vadd.f32 %v1004, %v1055
        %v1057 = vpop.f32.mrf.mxu0
        %1058 = vdwg.mxu0
        %v1059 = vld [vmem:[%s824] sm:$0xf]
        %v1060 = vld [vmem:[%s824 + $0x4] sm:$0xf]
        %v1061 = vld [vmem:[%s824 + $0x8] sm:$0xf]
        %v1062 = vld [vmem:[%s824 + $0xc] sm:$0xf]
        %v1063 = vld [vmem:[%s828] sm:$0x1]
        %v1065 = vlaneseq
        %v1066 = vshrl.u32 %v1065, 7
        %v1067 = vsub.s32 0, %v1066
        %v1068 = vrot.slane %v1063, %v1067
        %v1074 = vunpack.c.l.b16 %v1059
        %v1075 = vunpack.c.l.b16 %v1060
        %v1076 = vunpack.c.l.b16 %v1061
        %v1077 = vunpack.c.l.b16 %v1062
        %v1078 = vpack.c.b16 %v1075, %v1074
        %v1079 = vpack.c.b16 %v1077, %v1076
        %1082 = vmatprep.subr.bf16.mxu0 0
        %1083 = vmatpush1.bf16.msra.mxu0 0
        %1084 = vmatprep.subr.bf16.mxu0 0
        %1085 = vmatpush1.bf16.msra.mxu0 0
        %1086 = vmatprep.subr.bf16.mxu0 0
        %1087 = vmatpush1.bf16.msra.mxu0 0
        %1088 = vmatprep.subr.bf16.mxu0 0
        %1089 = vmatpush1.bf16.msra.mxu0 0
        %1090 = vmatprep.subr.bf16.mxu0 0
        %1091 = vmatpush1.bf16.msra.mxu0 0
        %1092 = vmatprep.subr.bf16.mxu0 0
        %1093 = vmatpush1.bf16.msra.mxu0 0
        %1094 = vmatprep.subr.bf16.mxu0 0
        %1095 = vmatpush1.bf16.msra.mxu0 %v1079
        %1096 = vmatprep.subr.bf16.mxu0 0
        %1097 = vmatpush1.bf16.msra.mxu0 %v1078
        %1098 = vmatprep.subr.bf16.mxu0 0
        %1099 = vmatpush2.bf16.msra.mxu0 0
        %1100 = vmatprep.subr.bf16.mxu0 0
        %1101 = vmatpush2.bf16.msra.mxu0 0
        %1102 = vmatprep.subr.bf16.mxu0 0
        %1103 = vmatpush2.bf16.msra.mxu0 0
        %1104 = vmatprep.subr.bf16.mxu0 0
        %1105 = vmatpush2.bf16.msra.mxu0 0
        %1106 = vmatprep.subr.bf16.mxu0 0
        %1107 = vmatpush2.bf16.msra.mxu0 0
        %1108 = vmatprep.subr.bf16.mxu0 0
        %1109 = vmatpush2.bf16.msra.mxu0 0
        %1110 = vmatprep.subr.bf16.mxu0 0
        %1111 = vmatpush2.bf16.msra.mxu0 0
        %1112 = vmatprep.subr.bf16.mxu0 0
        %1113 = vmatpush2.bf16.msra.mxu0 0
        %1114 = vmatprep.mubr.bf16.mxu0 0
        %1115 = vmatmul.mubr.bf16.gmra.mxu0 %v950
        %v1116 = vpop.f32.mrf.mxu0
        %v1117 = vadd.f32 %v1068, %v1116
        %v1118 = vpop.f32.mrf.mxu0
        %v1119 = vpop.f32.mrf.mxu0
        %v1120 = vadd.f32 %v1068, %v1119
        %v1121 = vpop.f32.mrf.mxu0
        %1122 = vdwg.mxu0
        %v1123 = vpack.c.bf16 %v993, %v993
        %v1124 = vpack.c.bf16 %v994, %v994
        %v1125 = vpack.c.bf16 %v1053, %v1053
        %v1126 = vpack.c.bf16 %v1056, %v1056
        %v1127 = vpack.c.bf16 %v1117, %v1117
        %v1128 = vpack.c.bf16 %v1120, %v1120
        %v1131 = vlaneseq
        %v1132 = vshrl.u32 %v1131, 7
        %v1133 = vsub.s32 0, %v1132
        %v1134 = vrot.slane %v923, %v1133
        %v1135 = vlaneseq
        %v1136 = vshrl.u32 %v1135, 7
        %v1137 = vsub.s32 0, %v1136
        %v1138 = vrot.slane %v924, %v1137
        %vm1141 = vcmask 130048
        %v1143 = vsel %vm1141, %v1123, 0
        %v1146 = vsel %vm1141, %v1125, 0
        %1148 = vmatprep.subr.bf16.mxu0 0
        %1149 = vmatpush1.bf16.xpose.msra.mxu0 0
        %1150 = vmatprep.subr.bf16.mxu0 0
        %1151 = vmatpush1.bf16.xpose.msra.mxu0 0
        %1152 = vmatprep.subr.bf16.mxu0 0
        %1153 = vmatpush1.bf16.xpose.msra.mxu0 0
        %1154 = vmatprep.subr.bf16.mxu0 0
        %1155 = vmatpush1.bf16.xpose.msra.mxu0 0
        %1156 = vmatprep.subr.bf16.mxu0 0
        %1157 = vmatpush1.bf16.xpose.msra.mxu0 0
        %1158 = vmatprep.subr.bf16.mxu0 0
        %1159 = vmatpush1.bf16.xpose.msra.mxu0 0
        %1160 = vmatprep.subr.bf16.mxu0 0
        %1161 = vmatpush1.bf16.xpose.msra.mxu0 0
        %1162 = vmatprep.subr.bf16.mxu0 0
        %1163 = vmatpush1.bf16.xpose.msra.mxu0 %v1146
        %1164 = vmatprep.subr.bf16.mxu0 0
        %1165 = vmatpush2.bf16.xpose.msra.mxu0 0
        %1166 = vmatprep.subr.bf16.mxu0 0
        %1167 = vmatpush2.bf16.xpose.msra.mxu0 0
        %1168 = vmatprep.subr.bf16.mxu0 0
        %1169 = vmatpush2.bf16.xpose.msra.mxu0 0
        %1170 = vmatprep.subr.bf16.mxu0 0
        %1171 = vmatpush2.bf16.xpose.msra.mxu0 0
        %1172 = vmatprep.subr.bf16.mxu0 0
        %1173 = vmatpush2.bf16.xpose.msra.mxu0 0
        %1174 = vmatprep.subr.bf16.mxu0 0
        %1175 = vmatpush2.bf16.xpose.msra.mxu0 0
        %1176 = vmatprep.subr.bf16.mxu0 0
        %1177 = vmatpush2.bf16.xpose.msra.mxu0 0
        %1178 = vmatprep.subr.bf16.mxu0 0
        %1179 = vmatpush2.bf16.xpose.msra.mxu0 0
        %1180 = vmatprep.mubr.bf16.mxu0 0
        %1181 = vmatmul.mubr.bf16.gmra.mxu0 %v1143
        %v1182 = vpop.f32.mrf.mxu0
        %v1183 = vadd.f32 %v1134, %v1182
        %v1184 = vpop.f32.mrf.mxu0
        %v1185 = vpop.f32.mrf.mxu0
        %v1186 = vpop.f32.mrf.mxu0
        %1187 = vdwg.mxu0
        %v1189 = vsel %vm1141, %v1124, 0
        %v1192 = vsel %vm1141, %v1126, 0
        %1194 = vmatprep.subr.bf16.mxu0 0
        %1195 = vmatpush1.bf16.xpose.msra.mxu0 0
        %1196 = vmatprep.subr.bf16.mxu0 0
        %1197 = vmatpush1.bf16.xpose.msra.mxu0 0
        %1198 = vmatprep.subr.bf16.mxu0 0
        %1199 = vmatpush1.bf16.xpose.msra.mxu0 0
        %1200 = vmatprep.subr.bf16.mxu0 0
        %1201 = vmatpush1.bf16.xpose.msra.mxu0 0
        %1202 = vmatprep.subr.bf16.mxu0 0
        %1203 = vmatpush1.bf16.xpose.msra.mxu0 0
        %1204 = vmatprep.subr.bf16.mxu0 0
        %1205 = vmatpush1.bf16.xpose.msra.mxu0 0
        %1206 = vmatprep.subr.bf16.mxu0 0
        %1207 = vmatpush1.bf16.xpose.msra.mxu0 0
        %1208 = vmatprep.subr.bf16.mxu0 0
        %1209 = vmatpush1.bf16.xpose.msra.mxu0 %v1192
        %1210 = vmatprep.subr.bf16.mxu0 0
        %1211 = vmatpush2.bf16.xpose.msra.mxu0 0
        %1212 = vmatprep.subr.bf16.mxu0 0
        %1213 = vmatpush2.bf16.xpose.msra.mxu0 0
        %1214 = vmatprep.subr.bf16.mxu0 0
        %1215 = vmatpush2.bf16.xpose.msra.mxu0 0
        %1216 = vmatprep.subr.bf16.mxu0 0
        %1217 = vmatpush2.bf16.xpose.msra.mxu0 0
        %1218 = vmatprep.subr.bf16.mxu0 0
        %1219 = vmatpush2.bf16.xpose.msra.mxu0 0
        %1220 = vmatprep.subr.bf16.mxu0 0
        %1221 = vmatpush2.bf16.xpose.msra.mxu0 0
        %1222 = vmatprep.subr.bf16.mxu0 0
        %1223 = vmatpush2.bf16.xpose.msra.mxu0 0
        %1224 = vmatprep.subr.bf16.mxu0 0
        %1225 = vmatpush2.bf16.xpose.msra.mxu0 0
        %1226 = vmatprep.mubr.bf16.mxu0 0
        %1227 = vmatmul.mubr.bf16.gmra.mxu0 %v1189
        %v1228 = vpop.f32.mrf.mxu0
        %v1229 = vadd.f32 %v1138, %v1228
        %v1230 = vpop.f32.mrf.mxu0
        %v1231 = vpop.f32.mrf.mxu0
        %v1232 = vpop.f32.mrf.mxu0
        %1233 = vdwg.mxu0
        %vm1234 = vcmask 64512
        %v1235 = vsel %vm1234, %v1183, -inf
        %1236 = vmax.xlane.f32.xlu0 %v1235
        %v1237 = vpop.xlane.xlu0 %1236
        %v1238 = vsel %vm1234, %v1229, -inf
        %1239 = vmax.xlane.f32.xlu0 %v1238
        %v1240 = vpop.xlane.xlu0 %1239
        %v1241 = vsub.f32 %v1183, %v1237
        %v1242 = vsub.f32 %v1229, %v1240
        %v1243 = vmul.f32 %v1241, 1.442695
        %v1244 = vpow.pop %v1243
        %v1245 = vmul.f32 %v1242, 1.442695
        %v1246 = vpow.pop %v1245
        %v1247 = vsel %vm1234, %v1244, 0.0
        %1248 = vadd.xlane.f32.xlu0 %v1247
        %v1249 = vpop.xlane.xlu0 %1248
        %v1250 = vsel %vm1234, %v1246, 0.0
        %1251 = vadd.xlane.f32.xlu0 %v1250
        %v1252 = vpop.xlane.xlu0 %1251
        %v1253 = vrcp.pop %v1249
        %v1254 = vrcp.pop %v1252
        %v1255 = vmul.f32 %v1244, %v1253
        %v1256 = vmul.f32 %v1246, %v1254
        %v1257 = vpack.c.bf16 %v1255, %v1255
        %v1258 = vpack.c.bf16 %v1256, %v1256
        %v1260 = vsel %vm1234, %v1257, 0
        %vm1262 = vcmask 1043456
        %v1264 = vsel %vm1262, %v1127, 0
        %1266 = vmatprep.subr.bf16.mxu0 0
        %1267 = vmatpush1.bf16.msra.mxu0 0
        %1268 = vmatprep.subr.bf16.mxu0 0
        %1269 = vmatpush1.bf16.msra.mxu0 0
        %1270 = vmatprep.subr.bf16.mxu0 0
        %1271 = vmatpush1.bf16.msra.mxu0 0
        %1272 = vmatprep.subr.bf16.mxu0 0
        %1273 = vmatpush1.bf16.msra.mxu0 0
        %1274 = vmatprep.subr.bf16.mxu0 0
        %1275 = vmatpush1.bf16.msra.mxu0 0
        %1276 = vmatprep.subr.bf16.mxu0 0
        %1277 = vmatpush1.bf16.msra.mxu0 0
        %1278 = vmatprep.subr.bf16.mxu0 0
        %1279 = vmatpush1.bf16.msra.mxu0 0
        %1280 = vmatprep.subr.bf16.mxu0 0
        %1281 = vmatpush1.bf16.msra.mxu0 %v1264
        %1282 = vmatprep.subr.bf16.mxu0 0
        %1283 = vmatpush2.bf16.msra.mxu0 0
        %1284 = vmatprep.subr.bf16.mxu0 0
        %1285 = vmatpush2.bf16.msra.mxu0 0
        %1286 = vmatprep.subr.bf16.mxu0 0
        %1287 = vmatpush2.bf16.msra.mxu0 0
        %1288 = vmatprep.subr.bf16.mxu0 0
        %1289 = vmatpush2.bf16.msra.mxu0 0
        %1290 = vmatprep.subr.bf16.mxu0 0
        %1291 = vmatpush2.bf16.msra.mxu0 0
        %1292 = vmatprep.subr.bf16.mxu0 0
        %1293 = vmatpush2.bf16.msra.mxu0 0
        %1294 = vmatprep.subr.bf16.mxu0 0
        %1295 = vmatpush2.bf16.msra.mxu0 0
        %1296 = vmatprep.subr.bf16.mxu0 0
        %1297 = vmatpush2.bf16.msra.mxu0 0
        %1298 = vmatprep.mubr.bf16.mxu0 0
        %1299 = vmatmul.mubr.bf16.gmra.mxu0 %v1260
        %v1300 = vpop.f32.mrf.mxu0
        %v1301 = vadd.f32 0.0, %v1300
        %v1302 = vpop.f32.mrf.mxu0
        %v1303 = vpop.f32.mrf.mxu0
        %v1304 = vpop.f32.mrf.mxu0
        %1305 = vdwg.mxu0
        %v1307 = vsel %vm1234, %v1258, 0
        %v1310 = vsel %vm1262, %v1128, 0
        %1312 = vmatprep.subr.bf16.mxu0 0
        %1313 = vmatpush1.bf16.msra.mxu0 0
        %1314 = vmatprep.subr.bf16.mxu0 0
        %1315 = vmatpush1.bf16.msra.mxu0 0
        %1316 = vmatprep.subr.bf16.mxu0 0
        %1317 = vmatpush1.bf16.msra.mxu0 0
        %1318 = vmatprep.subr.bf16.mxu0 0
        %1319 = vmatpush1.bf16.msra.mxu0 0
        %1320 = vmatprep.subr.bf16.mxu0 0
        %1321 = vmatpush1.bf16.msra.mxu0 0
        %1322 = vmatprep.subr.bf16.mxu0 0
        %1323 = vmatpush1.bf16.msra.mxu0 0
        %1324 = vmatprep.subr.bf16.mxu0 0
        %1325 = vmatpush1.bf16.msra.mxu0 0
        %1326 = vmatprep.subr.bf16.mxu0 0
        %1327 = vmatpush1.bf16.msra.mxu0 %v1310
        %1328 = vmatprep.subr.bf16.mxu0 0
        %1329 = vmatpush2.bf16.msra.mxu0 0
        %1330 = vmatprep.subr.bf16.mxu0 0
        %1331 = vmatpush2.bf16.msra.mxu0 0
        %1332 = vmatprep.subr.bf16.mxu0 0
        %1333 = vmatpush2.bf16.msra.mxu0 0
        %1334 = vmatprep.subr.bf16.mxu0 0
        %1335 = vmatpush2.bf16.msra.mxu0 0
        %1336 = vmatprep.subr.bf16.mxu0 0
        %1337 = vmatpush2.bf16.msra.mxu0 0
        %1338 = vmatprep.subr.bf16.mxu0 0
        %1339 = vmatpush2.bf16.msra.mxu0 0
        %1340 = vmatprep.subr.bf16.mxu0 0
        %1341 = vmatpush2.bf16.msra.mxu0 0
        %1342 = vmatprep.subr.bf16.mxu0 0
        %1343 = vmatpush2.bf16.msra.mxu0 0
        %1344 = vmatprep.mubr.bf16.mxu0 0
        %1345 = vmatmul.mubr.bf16.gmra.mxu0 %v1307
        %v1346 = vpop.f32.mrf.mxu0
        %v1347 = vadd.f32 0.0, %v1346
        %v1348 = vpop.f32.mrf.mxu0
        %v1349 = vpop.f32.mrf.mxu0
        %v1350 = vpop.f32.mrf.mxu0
        %1351 = vdwg.mxu0
        %v1352 = vpack.c.bf16 %v1347, %v1301
        %v1353 = vld [vmem:[%s833] sm:$0xf]
        %v1354 = vld [vmem:[%s833 + $0x4] sm:$0xf]
        %s1355 = scalar_lea.vmem %s806, 16
        %v1356 = vld [vmem:[%s1355] sm:$0xf]
        %v1357 = vld [vmem:[%s1355 + $0x4] sm:$0xf]
        %v1358 = vld [vmem:[%s1355 + $0x8] sm:$0xf]
        %v1359 = vld [vmem:[%s1355 + $0xc] sm:$0xf]
        %s1360 = scalar_lea.vmem %s810, 1
        %v1361 = vld [vmem:[%s1360] sm:$0x1]
        %v1363 = vlaneseq
        %v1364 = vshrl.u32 %v1363, 7
        %v1365 = vsub.s32 0, %v1364
        %v1366 = vrot.slane %v1361, %v1365
        %v1372 = vunpack.c.l.b16 %v1356
        %v1373 = vunpack.c.l.b16 %v1357
        %v1374 = vunpack.c.l.b16 %v1358
        %v1375 = vunpack.c.l.b16 %v1359
        %v1376 = vpack.c.b16 %v1373, %v1372
        %v1377 = vpack.c.b16 %v1375, %v1374
        %1380 = vmatprep.subr.bf16.mxu0 0
        %1381 = vmatpush1.bf16.msra.mxu0 0
        %1382 = vmatprep.subr.bf16.mxu0 0
        %1383 = vmatpush1.bf16.msra.mxu0 0
        %1384 = vmatprep.subr.bf16.mxu0 0
        %1385 = vmatpush1.bf16.msra.mxu0 0
        %1386 = vmatprep.subr.bf16.mxu0 0
        %1387 = vmatpush1.bf16.msra.mxu0 0
        %1388 = vmatprep.subr.bf16.mxu0 0
        %1389 = vmatpush1.bf16.msra.mxu0 0
        %1390 = vmatprep.subr.bf16.mxu0 0
        %1391 = vmatpush1.bf16.msra.mxu0 0
        %1392 = vmatprep.subr.bf16.mxu0 0
        %1393 = vmatpush1.bf16.msra.mxu0 %v1377
        %1394 = vmatprep.subr.bf16.mxu0 0
        %1395 = vmatpush1.bf16.msra.mxu0 %v1376
        %1396 = vmatprep.subr.bf16.mxu0 0
        %1397 = vmatpush2.bf16.msra.mxu0 0
        %1398 = vmatprep.subr.bf16.mxu0 0
        %1399 = vmatpush2.bf16.msra.mxu0 0
        %1400 = vmatprep.subr.bf16.mxu0 0
        %1401 = vmatpush2.bf16.msra.mxu0 0
        %1402 = vmatprep.subr.bf16.mxu0 0
        %1403 = vmatpush2.bf16.msra.mxu0 0
        %1404 = vmatprep.subr.bf16.mxu0 0
        %1405 = vmatpush2.bf16.msra.mxu0 0
        %1406 = vmatprep.subr.bf16.mxu0 0
        %1407 = vmatpush2.bf16.msra.mxu0 0
        %1408 = vmatprep.subr.bf16.mxu0 0
        %1409 = vmatpush2.bf16.msra.mxu0 0
        %1410 = vmatprep.subr.bf16.mxu0 0
        %1411 = vmatpush2.bf16.msra.mxu0 0
        %1412 = vmatprep.mubr.bf16.mxu0 0
        %1413 = vmatmul.mubr.bf16.gmra.mxu0 %v950
        %v1414 = vpop.f32.mrf.mxu0
        %v1415 = vadd.f32 %v1366, %v1414
        %v1416 = vpop.f32.mrf.mxu0
        %v1417 = vpop.f32.mrf.mxu0
        %v1418 = vadd.f32 %v1366, %v1417
        %v1419 = vpop.f32.mrf.mxu0
        %1420 = vdwg.mxu0
        %v1421 = vmul.f32 %v1415, 0.25
        %v1422 = vmul.f32 %v1418, 0.25
        %s1423 = scalar_lea.vmem %s815, 16
        %v1424 = vld [vmem:[%s1423] sm:$0xf]
        %v1425 = vld [vmem:[%s1423 + $0x4] sm:$0xf]
        %v1426 = vld [vmem:[%s1423 + $0x8] sm:$0xf]
        %v1427 = vld [vmem:[%s1423 + $0xc] sm:$0xf]
        %s1428 = scalar_lea.vmem %s819, 1
        %v1429 = vld [vmem:[%s1428] sm:$0x1]
        %v1431 = vlaneseq
        %v1432 = vshrl.u32 %v1431, 7
        %v1433 = vsub.s32 0, %v1432
        %v1434 = vrot.slane %v1429, %v1433
        %v1440 = vunpack.c.l.b16 %v1424
        %v1441 = vunpack.c.l.b16 %v1425
        %v1442 = vunpack.c.l.b16 %v1426
        %v1443 = vunpack.c.l.b16 %v1427
        %v1444 = vpack.c.b16 %v1441, %v1440
        %v1445 = vpack.c.b16 %v1443, %v1442
        %1448 = vmatprep.subr.bf16.mxu0 0
        %1449 = vmatpush1.bf16.msra.mxu0 0
        %1450 = vmatprep.subr.bf16.mxu0 0
        %1451 = vmatpush1.bf16.msra.mxu0 0
        %1452 = vmatprep.subr.bf16.mxu0 0
        %1453 = vmatpush1.bf16.msra.mxu0 0
        %1454 = vmatprep.subr.bf16.mxu0 0
        %1455 = vmatpush1.bf16.msra.mxu0 0
        %1456 = vmatprep.subr.bf16.mxu0 0
        %1457 = vmatpush1.bf16.msra.mxu0 0
        %1458 = vmatprep.subr.bf16.mxu0 0
        %1459 = vmatpush1.bf16.msra.mxu0 0
        %1460 = vmatprep.subr.bf16.mxu0 0
        %1461 = vmatpush1.bf16.msra.mxu0 %v1445
        %1462 = vmatprep.subr.bf16.mxu0 0
        %1463 = vmatpush1.bf16.msra.mxu0 %v1444
        %1464 = vmatprep.subr.bf16.mxu0 0
        %1465 = vmatpush2.bf16.msra.mxu0 0
        %1466 = vmatprep.subr.bf16.mxu0 0
        %1467 = vmatpush2.bf16.msra.mxu0 0
        %1468 = vmatprep.subr.bf16.mxu0 0
        %1469 = vmatpush2.bf16.msra.mxu0 0
        %1470 = vmatprep.subr.bf16.mxu0 0
        %1471 = vmatpush2.bf16.msra.mxu0 0
        %1472 = vmatprep.subr.bf16.mxu0 0
        %1473 = vmatpush2.bf16.msra.mxu0 0
        %1474 = vmatprep.subr.bf16.mxu0 0
        %1475 = vmatpush2.bf16.msra.mxu0 0
        %1476 = vmatprep.subr.bf16.mxu0 0
        %1477 = vmatpush2.bf16.msra.mxu0 0
        %1478 = vmatprep.subr.bf16.mxu0 0
        %1479 = vmatpush2.bf16.msra.mxu0 0
        %1480 = vmatprep.mubr.bf16.mxu0 0
        %1481 = vmatmul.mubr.bf16.gmra.mxu0 %v950
        %v1482 = vpop.f32.mrf.mxu0
        %v1483 = vadd.f32 %v1434, %v1482
        %v1484 = vpop.f32.mrf.mxu0
        %v1485 = vpop.f32.mrf.mxu0
        %v1486 = vadd.f32 %v1434, %v1485
        %v1487 = vpop.f32.mrf.mxu0
        %1488 = vdwg.mxu0
        %s1489 = scalar_lea.vmem %s824, 16
        %v1490 = vld [vmem:[%s1489] sm:$0xf]
        %v1491 = vld [vmem:[%s1489 + $0x4] sm:$0xf]
        %v1492 = vld [vmem:[%s1489 + $0x8] sm:$0xf]
        %v1493 = vld [vmem:[%s1489 + $0xc] sm:$0xf]
        %s1494 = scalar_lea.vmem %s828, 1
        %v1495 = vld [vmem:[%s1494] sm:$0x1]
        %v1497 = vlaneseq
        %v1498 = vshrl.u32 %v1497, 7
        %v1499 = vsub.s32 0, %v1498
        %v1500 = vrot.slane %v1495, %v1499
        %v1506 = vunpack.c.l.b16 %v1490
        %v1507 = vunpack.c.l.b16 %v1491
        %v1508 = vunpack.c.l.b16 %v1492
        %v1509 = vunpack.c.l.b16 %v1493
        %v1510 = vpack.c.b16 %v1507, %v1506
        %v1511 = vpack.c.b16 %v1509, %v1508
        %1514 = vmatprep.subr.bf16.mxu0 0
        %1515 = vmatpush1.bf16.msra.mxu0 0
        %1516 = vmatprep.subr.bf16.mxu0 0
        %1517 = vmatpush1.bf16.msra.mxu0 0
        %1518 = vmatprep.subr.bf16.mxu0 0
        %1519 = vmatpush1.bf16.msra.mxu0 0
        %1520 = vmatprep.subr.bf16.mxu0 0
        %1521 = vmatpush1.bf16.msra.mxu0 0
        %1522 = vmatprep.subr.bf16.mxu0 0
        %1523 = vmatpush1.bf16.msra.mxu0 0
        %1524 = vmatprep.subr.bf16.mxu0 0
        %1525 = vmatpush1.bf16.msra.mxu0 0
        %1526 = vmatprep.subr.bf16.mxu0 0
        %1527 = vmatpush1.bf16.msra.mxu0 %v1511
        %1528 = vmatprep.subr.bf16.mxu0 0
        %1529 = vmatpush1.bf16.msra.mxu0 %v1510
        %1530 = vmatprep.subr.bf16.mxu0 0
        %1531 = vmatpush2.bf16.msra.mxu0 0
        %1532 = vmatprep.subr.bf16.mxu0 0
        %1533 = vmatpush2.bf16.msra.mxu0 0
        %1534 = vmatprep.subr.bf16.mxu0 0
        %1535 = vmatpush2.bf16.msra.mxu0 0
        %1536 = vmatprep.subr.bf16.mxu0 0
        %1537 = vmatpush2.bf16.msra.mxu0 0
        %1538 = vmatprep.subr.bf16.mxu0 0
        %1539 = vmatpush2.bf16.msra.mxu0 0
        %1540 = vmatprep.subr.bf16.mxu0 0
        %1541 = vmatpush2.bf16.msra.mxu0 0
        %1542 = vmatprep.subr.bf16.mxu0 0
        %1543 = vmatpush2.bf16.msra.mxu0 0
        %1544 = vmatprep.subr.bf16.mxu0 0
        %1545 = vmatpush2.bf16.msra.mxu0 0
        %1546 = vmatprep.mubr.bf16.mxu0 0
        %1547 = vmatmul.mubr.bf16.gmra.mxu0 %v950
        %v1548 = vpop.f32.mrf.mxu0
        %v1549 = vadd.f32 %v1500, %v1548
        %v1550 = vpop.f32.mrf.mxu0
        %v1551 = vpop.f32.mrf.mxu0
        %v1552 = vadd.f32 %v1500, %v1551
        %v1553 = vpop.f32.mrf.mxu0
        %1554 = vdwg.mxu0
        %v1555 = vpack.c.bf16 %v1421, %v1421
        %v1556 = vpack.c.bf16 %v1422, %v1422
        %v1557 = vpack.c.bf16 %v1483, %v1483
        %v1558 = vpack.c.bf16 %v1486, %v1486
        %v1559 = vpack.c.bf16 %v1549, %v1549
        %v1560 = vpack.c.bf16 %v1552, %v1552
        %v1562 = vsel %vm1141, %v1555, 0
        %v1565 = vsel %vm1141, %v1557, 0
        %1567 = vmatprep.subr.bf16.mxu0 0
        %1568 = vmatpush1.bf16.xpose.msra.mxu0 0
        %1569 = vmatprep.subr.bf16.mxu0 0
        %1570 = vmatpush1.bf16.xpose.msra.mxu0 0
        %1571 = vmatprep.subr.bf16.mxu0 0
        %1572 = vmatpush1.bf16.xpose.msra.mxu0 0
        %1573 = vmatprep.subr.bf16.mxu0 0
        %1574 = vmatpush1.bf16.xpose.msra.mxu0 0
        %1575 = vmatprep.subr.bf16.mxu0 0
        %1576 = vmatpush1.bf16.xpose.msra.mxu0 0
        %1577 = vmatprep.subr.bf16.mxu0 0
        %1578 = vmatpush1.bf16.xpose.msra.mxu0 0
        %1579 = vmatprep.subr.bf16.mxu0 0
        %1580 = vmatpush1.bf16.xpose.msra.mxu0 0
        %1581 = vmatprep.subr.bf16.mxu0 0
        %1582 = vmatpush1.bf16.xpose.msra.mxu0 %v1565
        %1583 = vmatprep.subr.bf16.mxu0 0
        %1584 = vmatpush2.bf16.xpose.msra.mxu0 0
        %1585 = vmatprep.subr.bf16.mxu0 0
        %1586 = vmatpush2.bf16.xpose.msra.mxu0 0
        %1587 = vmatprep.subr.bf16.mxu0 0
        %1588 = vmatpush2.bf16.xpose.msra.mxu0 0
        %1589 = vmatprep.subr.bf16.mxu0 0
        %1590 = vmatpush2.bf16.xpose.msra.mxu0 0
        %1591 = vmatprep.subr.bf16.mxu0 0
        %1592 = vmatpush2.bf16.xpose.msra.mxu0 0
        %1593 = vmatprep.subr.bf16.mxu0 0
        %1594 = vmatpush2.bf16.xpose.msra.mxu0 0
        %1595 = vmatprep.subr.bf16.mxu0 0
        %1596 = vmatpush2.bf16.xpose.msra.mxu0 0
        %1597 = vmatprep.subr.bf16.mxu0 0
        %1598 = vmatpush2.bf16.xpose.msra.mxu0 0
        %1599 = vmatprep.mubr.bf16.mxu0 0
        %1600 = vmatmul.mubr.bf16.gmra.mxu0 %v1562
        %v1601 = vpop.f32.mrf.mxu0
        %v1602 = vadd.f32 %v1134, %v1601
        %v1603 = vpop.f32.mrf.mxu0
        %v1604 = vpop.f32.mrf.mxu0
        %v1605 = vpop.f32.mrf.mxu0
        %1606 = vdwg.mxu0
        %v1608 = vsel %vm1141, %v1556, 0
        %v1611 = vsel %vm1141, %v1558, 0
        %1613 = vmatprep.subr.bf16.mxu0 0
        %1614 = vmatpush1.bf16.xpose.msra.mxu0 0
        %1615 = vmatprep.subr.bf16.mxu0 0
        %1616 = vmatpush1.bf16.xpose.msra.mxu0 0
        %1617 = vmatprep.subr.bf16.mxu0 0
        %1618 = vmatpush1.bf16.xpose.msra.mxu0 0
        %1619 = vmatprep.subr.bf16.mxu0 0
        %1620 = vmatpush1.bf16.xpose.msra.mxu0 0
        %1621 = vmatprep.subr.bf16.mxu0 0
        %1622 = vmatpush1.bf16.xpose.msra.mxu0 0
        %1623 = vmatprep.subr.bf16.mxu0 0
        %1624 = vmatpush1.bf16.xpose.msra.mxu0 0
        %1625 = vmatprep.subr.bf16.mxu0 0
        %1626 = vmatpush1.bf16.xpose.msra.mxu0 0
        %1627 = vmatprep.subr.bf16.mxu0 0
        %1628 = vmatpush1.bf16.xpose.msra.mxu0 %v1611
        %1629 = vmatprep.subr.bf16.mxu0 0
        %1630 = vmatpush2.bf16.xpose.msra.mxu0 0
        %1631 = vmatprep.subr.bf16.mxu0 0
        %1632 = vmatpush2.bf16.xpose.msra.mxu0 0
        %1633 = vmatprep.subr.bf16.mxu0 0
        %1634 = vmatpush2.bf16.xpose.msra.mxu0 0
        %1635 = vmatprep.subr.bf16.mxu0 0
        %1636 = vmatpush2.bf16.xpose.msra.mxu0 0
        %1637 = vmatprep.subr.bf16.mxu0 0
        %1638 = vmatpush2.bf16.xpose.msra.mxu0 0
        %1639 = vmatprep.subr.bf16.mxu0 0
        %1640 = vmatpush2.bf16.xpose.msra.mxu0 0
        %1641 = vmatprep.subr.bf16.mxu0 0
        %1642 = vmatpush2.bf16.xpose.msra.mxu0 0
        %1643 = vmatprep.subr.bf16.mxu0 0
        %1644 = vmatpush2.bf16.xpose.msra.mxu0 0
        %1645 = vmatprep.mubr.bf16.mxu0 0
        %1646 = vmatmul.mubr.bf16.gmra.mxu0 %v1608
        %v1647 = vpop.f32.mrf.mxu0
        %v1648 = vadd.f32 %v1138, %v1647
        %v1649 = vpop.f32.mrf.mxu0
        %v1650 = vpop.f32.mrf.mxu0
        %v1651 = vpop.f32.mrf.mxu0
        %1652 = vdwg.mxu0
        %v1653 = vsel %vm1234, %v1602, -inf
        %1654 = vmax.xlane.f32.xlu0 %v1653
        %v1655 = vpop.xlane.xlu0 %1654
        %v1656 = vsel %vm1234, %v1648, -inf
        %1657 = vmax.xlane.f32.xlu0 %v1656
        %v1658 = vpop.xlane.xlu0 %1657
        %v1659 = vsub.f32 %v1602, %v1655
        %v1660 = vsub.f32 %v1648, %v1658
        %v1661 = vmul.f32 %v1659, 1.442695
        %v1662 = vpow.pop %v1661
        %v1663 = vmul.f32 %v1660, 1.442695
        %v1664 = vpow.pop %v1663
        %v1665 = vsel %vm1234, %v1662, 0.0
        %1666 = vadd.xlane.f32.xlu0 %v1665
        %v1667 = vpop.xlane.xlu0 %1666
        %v1668 = vsel %vm1234, %v1664, 0.0
        %1669 = vadd.xlane.f32.xlu0 %v1668
        %v1670 = vpop.xlane.xlu0 %1669
        %v1671 = vrcp.pop %v1667
        %v1672 = vrcp.pop %v1670
        %v1673 = vmul.f32 %v1662, %v1671
        %v1674 = vmul.f32 %v1664, %v1672
        %v1675 = vpack.c.bf16 %v1673, %v1673
        %v1676 = vpack.c.bf16 %v1674, %v1674
        %v1678 = vsel %vm1234, %v1675, 0
        %v1681 = vsel %vm1262, %v1559, 0
        %1683 = vmatprep.subr.bf16.mxu0 0
        %1684 = vmatpush1.bf16.msra.mxu0 0
        %1685 = vmatprep.subr.bf16.mxu0 0
        %1686 = vmatpush1.bf16.msra.mxu0 0
        %1687 = vmatprep.subr.bf16.mxu0 0
        %1688 = vmatpush1.bf16.msra.mxu0 0
        %1689 = vmatprep.subr.bf16.mxu0 0
        %1690 = vmatpush1.bf16.msra.mxu0 0
        %1691 = vmatprep.subr.bf16.mxu0 0
        %1692 = vmatpush1.bf16.msra.mxu0 0
        %1693 = vmatprep.subr.bf16.mxu0 0
        %1694 = vmatpush1.bf16.msra.mxu0 0
        %1695 = vmatprep.subr.bf16.mxu0 0
        %1696 = vmatpush1.bf16.msra.mxu0 0
        %1697 = vmatprep.subr.bf16.mxu0 0
        %1698 = vmatpush1.bf16.msra.mxu0 %v1681
        %1699 = vmatprep.subr.bf16.mxu0 0
        %1700 = vmatpush2.bf16.msra.mxu0 0
        %1701 = vmatprep.subr.bf16.mxu0 0
        %1702 = vmatpush2.bf16.msra.mxu0 0
        %1703 = vmatprep.subr.bf16.mxu0 0
        %1704 = vmatpush2.bf16.msra.mxu0 0
        %1705 = vmatprep.subr.bf16.mxu0 0
        %1706 = vmatpush2.bf16.msra.mxu0 0
        %1707 = vmatprep.subr.bf16.mxu0 0
        %1708 = vmatpush2.bf16.msra.mxu0 0
        %1709 = vmatprep.subr.bf16.mxu0 0
        %1710 = vmatpush2.bf16.msra.mxu0 0
        %1711 = vmatprep.subr.bf16.mxu0 0
        %1712 = vmatpush2.bf16.msra.mxu0 0
        %1713 = vmatprep.subr.bf16.mxu0 0
        %1714 = vmatpush2.bf16.msra.mxu0 0
        %1715 = vmatprep.mubr.bf16.mxu0 0
        %1716 = vmatmul.mubr.bf16.gmra.mxu0 %v1678
        %v1717 = vpop.f32.mrf.mxu0
        %v1718 = vadd.f32 0.0, %v1717
        %v1719 = vpop.f32.mrf.mxu0
        %v1720 = vpop.f32.mrf.mxu0
        %v1721 = vpop.f32.mrf.mxu0
        %1722 = vdwg.mxu0
        %v1724 = vsel %vm1234, %v1676, 0
        %v1727 = vsel %vm1262, %v1560, 0
        %1729 = vmatprep.subr.bf16.mxu0 0
        %1730 = vmatpush1.bf16.msra.mxu0 0
        %1731 = vmatprep.subr.bf16.mxu0 0
        %1732 = vmatpush1.bf16.msra.mxu0 0
        %1733 = vmatprep.subr.bf16.mxu0 0
        %1734 = vmatpush1.bf16.msra.mxu0 0
        %1735 = vmatprep.subr.bf16.mxu0 0
        %1736 = vmatpush1.bf16.msra.mxu0 0
        %1737 = vmatprep.subr.bf16.mxu0 0
        %1738 = vmatpush1.bf16.msra.mxu0 0
        %1739 = vmatprep.subr.bf16.mxu0 0
        %1740 = vmatpush1.bf16.msra.mxu0 0
        %1741 = vmatprep.subr.bf16.mxu0 0
        %1742 = vmatpush1.bf16.msra.mxu0 0
        %1743 = vmatprep.subr.bf16.mxu0 0
        %1744 = vmatpush1.bf16.msra.mxu0 %v1727
        %1745 = vmatprep.subr.bf16.mxu0 0
        %1746 = vmatpush2.bf16.msra.mxu0 0
        %1747 = vmatprep.subr.bf16.mxu0 0
        %1748 = vmatpush2.bf16.msra.mxu0 0
        %1749 = vmatprep.subr.bf16.mxu0 0
        %1750 = vmatpush2.bf16.msra.mxu0 0
        %1751 = vmatprep.subr.bf16.mxu0 0
        %1752 = vmatpush2.bf16.msra.mxu0 0
        %1753 = vmatprep.subr.bf16.mxu0 0
        %1754 = vmatpush2.bf16.msra.mxu0 0
        %1755 = vmatprep.subr.bf16.mxu0 0
        %1756 = vmatpush2.bf16.msra.mxu0 0
        %1757 = vmatprep.subr.bf16.mxu0 0
        %1758 = vmatpush2.bf16.msra.mxu0 0
        %1759 = vmatprep.subr.bf16.mxu0 0
        %1760 = vmatpush2.bf16.msra.mxu0 0
        %1761 = vmatprep.mubr.bf16.mxu0 0
        %1762 = vmatmul.mubr.bf16.gmra.mxu0 %v1724
        %v1763 = vpop.f32.mrf.mxu0
        %v1764 = vadd.f32 0.0, %v1763
        %v1765 = vpop.f32.mrf.mxu0
        %v1766 = vpop.f32.mrf.mxu0
        %v1767 = vpop.f32.mrf.mxu0
        %1768 = vdwg.mxu0
        %v1769 = vpack.c.bf16 %v1764, %v1718
        %s1770 = scalar_lea.vmem %s833, 8
        %v1771 = vld [vmem:[%s1770] sm:$0xf]
        %v1772 = vld [vmem:[%s1770 + $0x4] sm:$0xf]
        %v1775 = vunpack.c.l.b16 %v1771
        %v1776 = vunpack.c.l.b16 %v1772
        %v1777 = vpack.c.b16 %v1776, %v1775
        %v1780 = vsel %vm1141, %v1769, 0
        %1782 = vmatprep.subr.bf16.mxu0 0
        %1783 = vmatpush1.bf16.msra.mxu0 0
        %1784 = vmatprep.subr.bf16.mxu0 0
        %1785 = vmatpush1.bf16.msra.mxu0 0
        %1786 = vmatprep.subr.bf16.mxu0 0
        %1787 = vmatpush1.bf16.msra.mxu0 0
        %1788 = vmatprep.subr.bf16.mxu0 0
        %1789 = vmatpush1.bf16.msra.mxu0 0
        %1790 = vmatprep.subr.bf16.mxu0 0
        %1791 = vmatpush1.bf16.msra.mxu0 0
        %1792 = vmatprep.subr.bf16.mxu0 0
        %1793 = vmatpush1.bf16.msra.mxu0 0
        %1794 = vmatprep.subr.bf16.mxu0 0
        %1795 = vmatpush1.bf16.msra.mxu0 0
        %1796 = vmatprep.subr.bf16.mxu0 0
        %1797 = vmatpush1.bf16.msra.mxu0 %v1777
        %1798 = vmatprep.subr.bf16.mxu0 0
        %1799 = vmatpush2.bf16.msra.mxu0 0
        %1800 = vmatprep.subr.bf16.mxu0 0
        %1801 = vmatpush2.bf16.msra.mxu0 0
        %1802 = vmatprep.subr.bf16.mxu0 0
        %1803 = vmatpush2.bf16.msra.mxu0 0
        %1804 = vmatprep.subr.bf16.mxu0 0
        %1805 = vmatpush2.bf16.msra.mxu0 0
        %1806 = vmatprep.subr.bf16.mxu0 0
        %1807 = vmatpush2.bf16.msra.mxu0 0
        %1808 = vmatprep.subr.bf16.mxu0 0
        %1809 = vmatpush2.bf16.msra.mxu0 0
        %1810 = vmatprep.subr.bf16.mxu0 0
        %1811 = vmatpush2.bf16.msra.mxu0 0
        %1812 = vmatprep.subr.bf16.mxu0 0
        %1813 = vmatpush2.bf16.msra.mxu0 0
        %1814 = vmatprep.mubr.bf16.mxu0 0
        %1815 = vmatmul.mubr.bf16.gmra.mxu0 %v1780
        %v1816 = vpop.f32.mrf.mxu0
        %v1817 = vadd.f32 0.0, %v1816
        %v1818 = vpop.f32.mrf.mxu0
        %v1819 = vpop.f32.mrf.mxu0
        %v1820 = vadd.f32 0.0, %v1819
        %v1821 = vpop.f32.mrf.mxu0
        %1822 = vdwg.mxu0
        %v1825 = vunpack.c.l.b16 %v1353
        %v1826 = vunpack.c.l.b16 %v1354
        %v1827 = vpack.c.b16 %v1826, %v1825
        %v1830 = vsel %vm1141, %v1352, 0
        %1832 = vmatprep.subr.bf16.mxu0 0
        %1833 = vmatpush1.bf16.msra.mxu0 0
        %1834 = vmatprep.subr.bf16.mxu0 0
        %1835 = vmatpush1.bf16.msra.mxu0 0
        %1836 = vmatprep.subr.bf16.mxu0 0
        %1837 = vmatpush1.bf16.msra.mxu0 0
        %1838 = vmatprep.subr.bf16.mxu0 0
        %1839 = vmatpush1.bf16.msra.mxu0 0
        %1840 = vmatprep.subr.bf16.mxu0 0
        %1841 = vmatpush1.bf16.msra.mxu0 0
        %1842 = vmatprep.subr.bf16.mxu0 0
        %1843 = vmatpush1.bf16.msra.mxu0 0
        %1844 = vmatprep.subr.bf16.mxu0 0
        %1845 = vmatpush1.bf16.msra.mxu0 0
        %1846 = vmatprep.subr.bf16.mxu0 0
        %1847 = vmatpush1.bf16.msra.mxu0 %v1827
        %1848 = vmatprep.subr.bf16.mxu0 0
        %1849 = vmatpush2.bf16.msra.mxu0 0
        %1850 = vmatprep.subr.bf16.mxu0 0
        %1851 = vmatpush2.bf16.msra.mxu0 0
        %1852 = vmatprep.subr.bf16.mxu0 0
        %1853 = vmatpush2.bf16.msra.mxu0 0
        %1854 = vmatprep.subr.bf16.mxu0 0
        %1855 = vmatpush2.bf16.msra.mxu0 0
        %1856 = vmatprep.subr.bf16.mxu0 0
        %1857 = vmatpush2.bf16.msra.mxu0 0
        %1858 = vmatprep.subr.bf16.mxu0 0
        %1859 = vmatpush2.bf16.msra.mxu0 0
        %1860 = vmatprep.subr.bf16.mxu0 0
        %1861 = vmatpush2.bf16.msra.mxu0 0
        %1862 = vmatprep.subr.bf16.mxu0 0
        %1863 = vmatpush2.bf16.msra.mxu0 0
        %1864 = vmatprep.mubr.bf16.mxu0 0
        %1865 = vmatmul.mubr.bf16.gmra.mxu0 %v1830
        %v1866 = vpop.f32.mrf.mxu0
        %v1867 = vadd.f32 %v1817, %v1866
        %v1868 = vpop.f32.mrf.mxu0
        %v1869 = vpop.f32.mrf.mxu0
        %v1870 = vadd.f32 %v1820, %v1869
        %v1871 = vpop.f32.mrf.mxu0
        %1872 = vdwg.mxu0
        %v1873 = vld [vmem:[%s836] sm:$0x1]
        %v1875 = vlaneseq
        %v1876 = vshrl.u32 %v1875, 7
        %v1877 = vsub.s32 0, %v1876
        %v1878 = vrot.slane %v1873, %v1877
        %v1880 = vadd.f32 %v1867, %v1878
        %v1881 = vadd.f32 %v1870, %v1878
        %v1882 = vadd.f32 %v920, %v1880
        %v1883 = vadd.f32 %v921, %v1881
        %v1884 = vld [vmem:[%s839] sm:$0x1]
        %v1885 = vld [vmem:[%s842] sm:$0x1]
        %v1886 = vsel %vm948, %v1882, 0.0
        %1887 = vadd.xlane.f32.xlu0 %v1886
        %v1888 = vpop.xlane.xlu0 %1887
        %v1889 = vsel %vm948, %v1883, 0.0
        %1890 = vadd.xlane.f32.xlu0 %v1889
        %v1891 = vpop.xlane.xlu0 %1890
        %v1892 = vrcp.pop 32.0
        %v1893 = vmul.f32 %v1888, %v1892
        %v1894 = vmul.f32 %v1891, %v1892
        %v1895 = vsub.f32 %v1882, %v1893
        %v1896 = vsub.f32 %v1883, %v1894
        %v1897 = vmul.f32 %v1895, %v1895
        %v1898 = vmul.f32 %v1896, %v1896
        %v1899 = vsel %vm948, %v1897, 0.0
        %1900 = vadd.xlane.f32.xlu0 %v1899
        %v1901 = vpop.xlane.xlu0 %1900
        %v1902 = vsel %vm948, %v1898, 0.0
        %1903 = vadd.xlane.f32.xlu0 %v1902
        %v1904 = vpop.xlane.xlu0 %1903
        %v1905 = vmul.f32 %v1901, %v1892
        %v1906 = vmul.f32 %v1904, %v1892
        %v1907 = vadd.f32 %v1905, 1e-12
        %v1908 = vadd.f32 %v1906, 1e-12
        %v1909 = vrsqrt.pop %v1907
        %v1910 = vrsqrt.pop %v1908
        %v1911 = vmul.f32 %v1895, %v1909
        %v1912 = vmul.f32 %v1896, %v1910
        %v1914 = vlaneseq
        %v1915 = vshrl.u32 %v1914, 7
        %v1916 = vsub.s32 0, %v1915
        %v1917 = vrot.slane %v1884, %v1916
        %v1919 = vmul.f32 %v1911, %v1917
        %v1920 = vmul.f32 %v1912, %v1917
        %v1922 = vlaneseq
        %v1923 = vshrl.u32 %v1922, 7
        %v1924 = vsub.s32 0, %v1923
        %v1925 = vrot.slane %v1885, %v1924
        %v1927 = vadd.f32 %v1919, %v1925
        %v1928 = vadd.f32 %v1920, %v1925
        %v1929 = vpack.c.bf16 %v1928, %v1927
        %v1930 = vld [vmem:[%s847] sm:$0xf]
        %v1931 = vld [vmem:[%s847 + $0x4] sm:$0xf]
        %v1932 = vld [vmem:[%s847 + $0x8] sm:$0xf]
        %v1933 = vld [vmem:[%s847 + $0xc] sm:$0xf]
        %v1934 = vld [vmem:[%s850] sm:$0x1]
        %v1936 = vlaneseq
        %v1937 = vshrl.u32 %v1936, 7
        %v1938 = vsub.s32 0, %v1937
        %v1939 = vrot.slane %v1934, %v1938
        %v1945 = vunpack.c.l.b16 %v1930
        %v1946 = vunpack.c.l.b16 %v1931
        %v1947 = vunpack.c.l.b16 %v1932
        %v1948 = vunpack.c.l.b16 %v1933
        %v1949 = vpack.c.b16 %v1946, %v1945
        %v1950 = vpack.c.b16 %v1948, %v1947
        %v1954 = vsel %vm948, %v1929, 0
        %1956 = vmatprep.subr.bf16.mxu0 0
        %1957 = vmatpush1.bf16.msra.mxu0 0
        %1958 = vmatprep.subr.bf16.mxu0 0
        %1959 = vmatpush1.bf16.msra.mxu0 0
        %1960 = vmatprep.subr.bf16.mxu0 0
        %1961 = vmatpush1.bf16.msra.mxu0 0
        %1962 = vmatprep.subr.bf16.mxu0 0
        %1963 = vmatpush1.bf16.msra.mxu0 0
        %1964 = vmatprep.subr.bf16.mxu0 0
        %1965 = vmatpush1.bf16.msra.mxu0 0
        %1966 = vmatprep.subr.bf16.mxu0 0
        %1967 = vmatpush1.bf16.msra.mxu0 0
        %1968 = vmatprep.subr.bf16.mxu0 0
        %1969 = vmatpush1.bf16.msra.mxu0 %v1950
        %1970 = vmatprep.subr.bf16.mxu0 0
        %1971 = vmatpush1.bf16.msra.mxu0 %v1949
        %1972 = vmatprep.subr.bf16.mxu0 0
        %1973 = vmatpush2.bf16.msra.mxu0 0
        %1974 = vmatprep.subr.bf16.mxu0 0
        %1975 = vmatpush2.bf16.msra.mxu0 0
        %1976 = vmatprep.subr.bf16.mxu0 0
        %1977 = vmatpush2.bf16.msra.mxu0 0
        %1978 = vmatprep.subr.bf16.mxu0 0
        %1979 = vmatpush2.bf16.msra.mxu0 0
        %1980 = vmatprep.subr.bf16.mxu0 0
        %1981 = vmatpush2.bf16.msra.mxu0 0
        %1982 = vmatprep.subr.bf16.mxu0 0
        %1983 = vmatpush2.bf16.msra.mxu0 0
        %1984 = vmatprep.subr.bf16.mxu0 0
        %1985 = vmatpush2.bf16.msra.mxu0 0
        %1986 = vmatprep.subr.bf16.mxu0 0
        %1987 = vmatpush2.bf16.msra.mxu0 0
        %1988 = vmatprep.mubr.bf16.mxu0 0
        %1989 = vmatmul.mubr.bf16.gmra.mxu0 %v1954
        %v1990 = vpop.f32.mrf.mxu0
        %v1991 = vadd.f32 %v1939, %v1990
        %v1992 = vpop.f32.mrf.mxu0
        %v1993 = vpop.f32.mrf.mxu0
        %v1994 = vadd.f32 %v1939, %v1993
        %v1995 = vpop.f32.mrf.mxu0
        %1996 = vdwg.mxu0
        %v1997 = vmul.f32 %v1991, 0.5
        %v1998 = vmul.f32 %v1994, 0.5
        %v1999 = vmul.f32 %v1991, 0.044715
        %v2000 = vmul.f32 %v1994, 0.044715
        %v2001 = vmul.f32 %v1999, %v1991
        %v2002 = vmul.f32 %v2000, %v1994
        %v2003 = vmul.f32 %v2001, %v1991
        %v2004 = vmul.f32 %v2002, %v1994
        %v2005 = vadd.f32 %v1991, %v2003
        %v2006 = vadd.f32 %v1994, %v2004
        %v2007 = vmul.f32 %v2005, 0.7978846
        %v2008 = vmul.f32 %v2006, 0.7978846
        %v2009 = vtanh.pop %v2007
        %v2010 = vtanh.pop %v2008
        %v2011 = vadd.f32 %v2009, 1.0
        %v2012 = vadd.f32 %v2010, 1.0
        %v2013 = vmul.f32 %v1997, %v2011
        %v2014 = vmul.f32 %v1998, %v2012
        %v2015 = vpack.c.bf16 %v2014, %v2013
        %v2016 = vld [vmem:[%s855] sm:$0xf]
        %v2017 = vld [vmem:[%s855 + $0x4] sm:$0xf]
        %v2018 = vld [vmem:[%s855 + $0x8] sm:$0xf]
        %v2019 = vld [vmem:[%s855 + $0xc] sm:$0xf]
        %v2020 = vld [vmem:[%s855 + $0x10] sm:$0xf]
        %v2021 = vld [vmem:[%s855 + $0x14] sm:$0xf]
        %v2022 = vld [vmem:[%s855 + $0x18] sm:$0xf]
        %v2023 = vld [vmem:[%s855 + $0x1c] sm:$0xf]
        %v2024 = vld [vmem:[%s855 + $0x20] sm:$0xf]
        %v2025 = vld [vmem:[%s855 + $0x24] sm:$0xf]
        %v2026 = vld [vmem:[%s855 + $0x28] sm:$0xf]
        %v2027 = vld [vmem:[%s855 + $0x2c] sm:$0xf]
        %v2028 = vld [vmem:[%s855 + $0x30] sm:$0xf]
        %v2029 = vld [vmem:[%s855 + $0x34] sm:$0xf]
        %v2030 = vld [vmem:[%s855 + $0x38] sm:$0xf]
        %v2031 = vld [vmem:[%s855 + $0x3c] sm:$0xf]
        %v2032 = vld [vmem:[%s858] sm:$0x1]
        %v2034 = vlaneseq
        %v2035 = vshrl.u32 %v2034, 7
        %v2036 = vsub.s32 0, %v2035
        %v2037 = vrot.slane %v2032, %v2036
        %v2055 = vunpack.c.l.b16 %v2016
        %v2056 = vunpack.c.l.b16 %v2017
        %v2057 = vunpack.c.l.b16 %v2018
        %v2058 = vunpack.c.l.b16 %v2019
        %v2059 = vunpack.c.l.b16 %v2020
        %v2060 = vunpack.c.l.b16 %v2021
        %v2061 = vunpack.c.l.b16 %v2022
        %v2062 = vunpack.c.l.b16 %v2023
        %v2063 = vunpack.c.l.b16 %v2024
        %v2064 = vunpack.c.l.b16 %v2025
        %v2065 = vunpack.c.l.b16 %v2026
        %v2066 = vunpack.c.l.b16 %v2027
        %v2067 = vunpack.c.l.b16 %v2028
        %v2068 = vunpack.c.l.b16 %v2029
        %v2069 = vunpack.c.l.b16 %v2030
        %v2070 = vunpack.c.l.b16 %v2031
        %v2071 = vpack.c.b16 %v2056, %v2055
        %v2072 = vpack.c.b16 %v2058, %v2057
        %v2073 = vpack.c.b16 %v2060, %v2059
        %v2074 = vpack.c.b16 %v2062, %v2061
        %v2075 = vpack.c.b16 %v2064, %v2063
        %v2076 = vpack.c.b16 %v2066, %v2065
        %v2077 = vpack.c.b16 %v2068, %v2067
        %v2078 = vpack.c.b16 %v2070, %v2069
        %2087 = vmatprep.subr.bf16.mxu0 0
        %2088 = vmatpush1.bf16.msra.mxu0 %v2078
        %2089 = vmatprep.subr.bf16.mxu0 0
        %2090 = vmatpush1.bf16.msra.mxu0 %v2077
        %2091 = vmatprep.subr.bf16.mxu0 0
        %2092 = vmatpush1.bf16.msra.mxu0 %v2076
        %2093 = vmatprep.subr.bf16.mxu0 0
        %2094 = vmatpush1.bf16.msra.mxu0 %v2075
        %2095 = vmatprep.subr.bf16.mxu0 0
        %2096 = vmatpush1.bf16.msra.mxu0 %v2074
        %2097 = vmatprep.subr.bf16.mxu0 0
        %2098 = vmatpush1.bf16.msra.mxu0 %v2073
        %2099 = vmatprep.subr.bf16.mxu0 0
        %2100 = vmatpush1.bf16.msra.mxu0 %v2072
        %2101 = vmatprep.subr.bf16.mxu0 0
        %2102 = vmatpush1.bf16.msra.mxu0 %v2071
        %2103 = vmatprep.subr.bf16.mxu0 0
        %2104 = vmatpush2.bf16.msra.mxu0 0
        %2105 = vmatprep.subr.bf16.mxu0 0
        %2106 = vmatpush2.bf16.msra.mxu0 0
        %2107 = vmatprep.subr.bf16.mxu0 0
        %2108 = vmatpush2.bf16.msra.mxu0 0
        %2109 = vmatprep.subr.bf16.mxu0 0
        %2110 = vmatpush2.bf16.msra.mxu0 0
        %2111 = vmatprep.subr.bf16.mxu0 0
        %2112 = vmatpush2.bf16.msra.mxu0 0
        %2113 = vmatprep.subr.bf16.mxu0 0
        %2114 = vmatpush2.bf16.msra.mxu0 0
        %2115 = vmatprep.subr.bf16.mxu0 0
        %2116 = vmatpush2.bf16.msra.mxu0 0
        %2117 = vmatprep.subr.bf16.mxu0 0
        %2118 = vmatpush2.bf16.msra.mxu0 0
        %2119 = vmatprep.mubr.bf16.mxu0 0
        %2120 = vmatmul.mubr.bf16.gmra.mxu0 %v2015
        %v2121 = vpop.f32.mrf.mxu0
        %v2122 = vadd.f32 %v2037, %v2121
        %v2123 = vpop.f32.mrf.mxu0
        %v2124 = vpop.f32.mrf.mxu0
        %v2125 = vadd.f32 %v2037, %v2124
        %v2126 = vpop.f32.mrf.mxu0
        %2127 = vdwg.mxu0
        %v2128 = vadd.f32 %v1927, %v2122
        %v2129 = vadd.f32 %v1928, %v2125
        %v2130 = vld [vmem:[%s861] sm:$0x1]
        %v2131 = vld [vmem:[%s864] sm:$0x1]
        %v2132 = vsel %vm948, %v2128, 0.0
        %2133 = vadd.xlane.f32.xlu0 %v2132
        %v2134 = vpop.xlane.xlu0 %2133
        %v2135 = vsel %vm948, %v2129, 0.0
        %2136 = vadd.xlane.f32.xlu0 %v2135
        %v2137 = vpop.xlane.xlu0 %2136
        %v2138 = vmul.f32 %v2134, %v1892
        %v2139 = vmul.f32 %v2137, %v1892
        %v2140 = vsub.f32 %v2128, %v2138
        %v2141 = vsub.f32 %v2129, %v2139
        %v2142 = vmul.f32 %v2140, %v2140
        %v2143 = vmul.f32 %v2141, %v2141
        %v2144 = vsel %vm948, %v2142, 0.0
        %2145 = vadd.xlane.f32.xlu0 %v2144
        %v2146 = vpop.xlane.xlu0 %2145
        %v2147 = vsel %vm948, %v2143, 0.0
        %2148 = vadd.xlane.f32.xlu0 %v2147
        %v2149 = vpop.xlane.xlu0 %2148
        %v2150 = vmul.f32 %v2146, %v1892
        %v2151 = vmul.f32 %v2149, %v1892
        %v2152 = vadd.f32 %v2150, 1e-12
        %v2153 = vadd.f32 %v2151, 1e-12
        %v2154 = vrsqrt.pop %v2152
        %v2155 = vrsqrt.pop %v2153
        %v2156 = vmul.f32 %v2140, %v2154
        %v2157 = vmul.f32 %v2141, %v2155
        %v2159 = vlaneseq
        %v2160 = vshrl.u32 %v2159, 7
        %v2161 = vsub.s32 0, %v2160
        %v2162 = vrot.slane %v2130, %v2161
        %v2164 = vmul.f32 %v2156, %v2162
        %v2165 = vmul.f32 %v2157, %v2162
        %v2167 = vlaneseq
        %v2168 = vshrl.u32 %v2167, 7
        %v2169 = vsub.s32 0, %v2168
        %v2170 = vrot.slane %v2131, %v2169
        %v2172 = vadd.f32 %v2164, %v2170
        %v2173 = vadd.f32 %v2165, %v2170
        %2174 = vst.msk [vmem:[#allocation2] sm:$0xff] %vm948, %v2172
        %2175 = vst.msk [vmem:[#allocation2 + $0x8] sm:$0xff] %vm948, %v2173
        %p2176 = scmp.eq.s32.totalorder %s32, 1
        // Predicated region
        $region105: #{tpu_custom_call.1} parent=99 // pred_check
          %p2177 = pneg %p2176
        $region106: #{tpu_custom_call.1} parent=99 // pred_check_branch
          %2179 = sbr.rel (%p2177) target = $region108
        $region107: #{tpu_custom_call.1} parent=99 // pred_region
          %2180 = vst.msk [vmem:[#allocation3] sm:$0xff] %vm948, %v2172
          %2181 = vst.msk [vmem:[#allocation3 + $0x8] sm:$0xff] %vm948, %v2173
        $region108: #{tpu_custom_call.1} parent=99 // pred_fallthru
          _
        // Predicated region
        $region109: #{tpu_custom_call.1} parent=99 // pred_check
          %p2182 = pneg %p545
        $region110: #{tpu_custom_call.1} parent=99 // pred_check_branch
          %2184 = sbr.rel (%p2182) target = $region112
        $region111: #{tpu_custom_call.1} parent=99 // pred_region
          %s2186 = ssub.s32 256, 256
          %2187 = vsyncadd [#allocation4], %s2186
          %s2188 = sshll.u32 [#allocation3], 4
          %s2189 = int_to_ptr.vmem [resolvable:$true] %s2188
          %2194 = dma.vmem_to_hbm [thread:$0]  %s2189, 256, %s20, [#allocation4], 128, 128, 8
        $region112: #{tpu_custom_call.1} parent=99 // pred_fallthru
          _
        // Predicated region
        $region113: #{tpu_custom_call.1} parent=99 // pred_check
          %p2195 = pneg %p545
        $region114: #{tpu_custom_call.1} parent=99 // pred_check_branch
          %2197 = sbr.rel (%p2195) target = $region116
        $region115: #{tpu_custom_call.1} parent=99 // pred_region
          %2198 = dma.done [#allocation4], 256
        $region116: #{tpu_custom_call.1} parent=99 // pred_fallthru
          _
      $region100: #{tpu_custom_call.1} parent=5 // pred_fallthru
        _
      %p2199 = scmp.le.s32.totalorder 2, %s27
      // Predicated region
      $region117: #{tpu_custom_call.1} parent=5 // pred_check
        %p2200 = pneg %p2199
      $region118: #{tpu_custom_call.1} parent=5 // pred_check_branch
        %2202 = sbr.rel (%p2200) target = $region120
      $region119: #{tpu_custom_call.1} parent=5 // pred_region
        %s2203 = ssub.s32 %s27, 2
      $region120: #{tpu_custom_call.1} parent=5 // pred_fallthru
        _
    $region6: #{tpu_custom_call.1} parent=1 // loop_footer
      %s31 = sadd.s32 1, %s27
    $region7: #{tpu_custom_call.1} parent=1 // loop_footer_branch
      %26 = sbr.rel target = $region3
    $region8: #{tpu_custom_call.1} parent=1 // loop_exit
      _
    %2204 = vsyncpa [#allocation4], 1
    %s2205 = scalar_lea.sflag [#allocation4], 1
    %2206 = vsyncpa %s2205, 1

</llo_original>
